<compile_context>
chip_gen: v6e
topology: v6e:2x2x1
jax: 0.10.0
libtpu: 0.0.40
codegen_flags: <defaults>
</compile_context>

<pallas_src>
import functools

import jax
import jax.numpy as jnp
from jax.experimental import pallas as pl
from jax.experimental.pallas import tpu as pltpu


def _round_up(n: int, m: int) -> int:
    return ((n + m - 1) // m) * m


def _default_block_rows() -> int:
    """8192 rows/step for v5e/v6e; 16384 on v7x (higher HBM BW, step-overhead bound)."""
    try:
        kind = jax.devices()[0].device_kind.lower()
    except Exception:
        return 8192
    if "v7" in kind:
        return 16384
    return 8192


@functools.lru_cache(maxsize=None)
def _lane_dense_pack_supported() -> bool:
    """Probe whether Mosaic lowers the (N,1)->(N/128,128) sublane->lane relayout."""
    def _probe_kernel(x_ref, o_ref):
        o_ref[...] = x_ref[...].reshape(o_ref.shape)

    try:
        for rows in (128, 1024):
            x = jnp.arange(rows, dtype=jnp.float32).reshape(rows, 1)
            y = pl.pallas_call(
                _probe_kernel,
                out_shape=jax.ShapeDtypeStruct((rows // 128, 128), jnp.float32),
            )(x)
            y = jax.block_until_ready(y)
            if not bool(jnp.allclose(y, x.reshape(rows // 128, 128))):
                return False
        return True
    except Exception:
        return False


def _top_net_kernel_packed(x_ref, w_ref, b_ref, o_ref):
    """MXU matvec + lane-dense epilogue.

    x_ref: (tb, D) activations, streamed.
    w_ref: (D, 128) weight column replicated across 128 lanes, resident.
    b_ref: (1,) bias in SMEM.
    o_ref: (tb//128, 128) lane-dense packed sigmoid outputs (row r*128+l -> [r, l]).
    """
    zfull = jnp.dot(x_ref[...], w_ref[...],
                    preferred_element_type=jnp.float32,
                    precision=jax.lax.Precision.HIGHEST)      # (tb, 128), cols identical
    z = zfull[:, :1]                                          # (tb, 1) true logits
    zp = z.reshape(o_ref.shape)                               # pack to (tb//128, 128)
    o_ref[...] = jax.nn.sigmoid(zp + b_ref[0]).astype(o_ref.dtype)


def _top_net_kernel_rowvec(x_ref, w_ref, b_ref, o_ref):
    """Fallback: same MXU matvec, but (tb, 1) row-vector output (sparse epilogue)."""
    zfull = jnp.dot(x_ref[...], w_ref[...],
                    preferred_element_type=jnp.float32,
                    precision=jax.lax.Precision.HIGHEST)      # (tb, 128)
    z = zfull[:, :1]                                          # (tb, 1)
    o_ref[...] = jax.nn.sigmoid(z + b_ref[0]).astype(o_ref.dtype)


def top_net_forward(x, weight, bias, *, block_rows=None, lane_dense_output=None):
    """x: (B, D); weight: (1, D); bias: (1,)  ->  (B, 1) = sigmoid(x @ W.T + b)."""
    B, D = x.shape
    assert weight.shape == (1, D)
    assert bias.shape == (1,)

    if block_rows is None:
        block_rows = _default_block_rows()
    if lane_dense_output is None:
        lane_dense_output = _lane_dense_pack_supported()

    # Pad the batch to a multiple of 128 so the packed (tb//128, 128) output
    # tiles line up with row-major order and no block exceeds the array extent.
    # TODO(synk): stream the <=127-row ragged tail separately instead of paying
    # one extra HBM pass for the pad (only hit when B % 128 != 0).
    Bp = _round_up(max(B, 128), 128)
    if Bp != B:
        x = jnp.pad(x, ((0, Bp - B), (0, 0)))

    # Batch tile (rows per grid step):
    #  * aim for ~ceil(B/2) so the "parallel" axis has >=2 steps (both v7x TCs);
    #  * round to a multiple of 1024 so the packed out block's sublane dim
    #    (tb//128) is a multiple of 8 (the (8,128) block rule), unless a single
    #    block covers the whole (padded) batch -- block == full array is always
    #    legal.
    # VMEM (f32, lane-padded to 128): x block = tb*512 B per pipeline buffer;
    # packed out block = tb*4 B.  tb=8192 -> ~8 MiB, tb=16384 -> ~16 MiB
    # double-buffered: inside the scoped-VMEM defaults on all generations.
    target = min(block_rows, _round_up(pl.cdiv(Bp, 2), 128))
    tb = _round_up(target, 1024)
    if tb >= Bp:
        tb = Bp
    grid = (pl.cdiv(Bp, tb),)

    # Replicate the weight row into an MXU-shaped (D, 128) RHS (tiny; 20 KiB at D=40).
    w_rhs = jnp.broadcast_to(weight.reshape(D, 1), (D, 128)).astype(x.dtype)
    bias_f32 = bias.astype(jnp.float32)

    cost = pl.CostEstimate(
        flops=2 * Bp * D * 128 + Bp,       # MXU does 128 replicated columns
        transcendentals=Bp,                # one sigmoid per row
        bytes_accessed=(Bp * D + D * 128 + 1 + Bp) * 4,
    )

    in_specs = [
        pl.BlockSpec((tb, D), lambda i: (i, 0)),               # x: streamed
        pl.BlockSpec((D, 128), lambda i: (0, 0)),              # w_rhs: resident
        pl.BlockSpec(memory_space=pltpu.MemorySpace.SMEM),     # bias: scalar
    ]
    cparams = pltpu.CompilerParams(dimension_semantics=("parallel",))

    if lane_dense_output:
        out = pl.pallas_call(
            _top_net_kernel_packed,
            out_shape=jax.ShapeDtypeStruct((Bp // 128, 128), x.dtype),
            grid=grid,
            in_specs=in_specs,
            out_specs=pl.BlockSpec((tb // 128, 128), lambda i: (i, 0)),
            compiler_params=cparams,
            cost_estimate=cost,
        )(x, w_rhs, bias_f32)
        out = out.reshape(Bp, 1)           # free row-major reshape in the wrapper
    else:
        out = pl.pallas_call(
            _top_net_kernel_rowvec,
            out_shape=jax.ShapeDtypeStruct((Bp, 1), x.dtype),
            grid=grid,
            in_specs=in_specs,
            out_specs=pl.BlockSpec((tb, 1), lambda i: (i, 0)),
            compiler_params=cparams,
            cost_estimate=cost,
        )(x, w_rhs, bias_f32)

    return out[:B] if Bp != B else out


if __name__ == "__main__":
    # Shapes consistent with the module: client_num=2 -> in_features=40.
    client_num = 2
    in_features = client_num * 20

    key = jax.random.PRNGKey(0)
    kw, kb = jax.random.split(key)

    # nn.Linear-style init, then clamp the weight to [0, 1] as top_net does.
    bound = 1.0 / float(in_features) ** 0.5
    weight = jax.random.uniform(kw, (1, in_features), jnp.float32,
                                minval=-bound, maxval=bound)
    weight = jnp.clip(weight, 0.0, 1.0)
    bias = jax.random.uniform(kb, (1,), jnp.float32, minval=-bound, maxval=bound)

    def reference(x):
        z = jnp.sum(x * weight, axis=-1, keepdims=True) + bias  # exact f32 matvec
        return jax.nn.sigmoid(z)

    cases = [
        ("single-block", 128, {}),                       # one tile == whole batch
        ("multi-block", 2048, dict(block_rows=1024)),    # 2 pipelined grid steps
        ("ragged", 200, {}),                             # batch not a multiple of 128
    ]
    for name, batch, kwargs in cases:
        x = jax.random.normal(jax.random.fold_in(key, batch),
                              (batch, in_features), dtype=jnp.float32)
        y = top_net_forward(x, weight, bias, **kwargs)
        y = jax.block_until_ready(y)
        y_ref = reference(x)
        assert y.shape == (batch, 1), (name, y.shape)
        assert jnp.allclose(y, y_ref, atol=2e-5, rtol=2e-5), name

    print("KERNEL_OK")
</pallas_src>

<mosaic_0001>
module attributes {stable_mosaic.version = 11 : i64} {
  func.func @_probe_kernel(%arg0: memref<128x1xf32, #tpu.memory_space<vmem>>, %arg1: memref<1x128xf32, #tpu.memory_space<vmem>>) attributes {dimension_semantics = [], scalar_prefetch = 0 : i64, scratch_operands = 0 : i64, tpu.core_type = #tpu.core_type<tc>} {
    %c0 = arith.constant 0 : index
    %c0_0 = arith.constant 0 : index
    %0 = vector.load %arg0[%c0, %c0_0] : memref<128x1xf32, #tpu.memory_space<vmem>>, vector<128x1xf32>
    %1 = vector.shape_cast %0 : vector<128x1xf32> to vector<1x128xf32>
    %c0_1 = arith.constant 0 : index
    %c0_2 = arith.constant 0 : index
    %2 = vector.load %arg1[%c0_1, %c0_2] : memref<1x128xf32, #tpu.memory_space<vmem>>, vector<1x128xf32>
    tpu.vector_store %arg1[%c0_1, %c0_2], %1 {strides = array<i32>} : memref<1x128xf32, #tpu.memory_space<vmem>>, vector<1x128xf32>,
    return
  }
}

module attributes {stable_mosaic.version = 11 : i64} {
  func.func @_top_net_kernel_rowvec(%arg0: i32, %arg1: memref<128x40xf32, #tpu.memory_space<vmem>>, %arg2: memref<40x128xf32, #tpu.memory_space<vmem>>, %arg3: memref<1xf32, #tpu.memory_space<smem>>, %arg4: memref<128x1xf32, #tpu.memory_space<vmem>>) attributes {dimension_semantics = [#tpu.dimension_semantics<parallel>], iteration_bounds = array<i64: 1>, scalar_prefetch = 0 : i64, scratch_operands = 0 : i64, tpu.core_type = #tpu.core_type<tc>, window_params = [{transform_indices = @transform_0, window_bounds = array<i64: 128, 40>}, {pipeline_mode = #tpu.pipeline_mode<synchronous>, transform_indices = @transform_1, window_bounds = array<i64: 40, 128>}, {transform_indices = @transform_2, window_bounds = array<i64: 1>}, {transform_indices = @transform_3, window_bounds = array<i64: 128, 1>}]} {
    %c0 = arith.constant 0 : index
    %c0_0 = arith.constant 0 : index
    %0 = vector.load %arg1[%c0, %c0_0] : memref<128x40xf32, #tpu.memory_space<vmem>>, vector<128x40xf32>
    %c0_1 = arith.constant 0 : index
    %c0_2 = arith.constant 0 : index
    %1 = vector.load %arg2[%c0_1, %c0_2] : memref<40x128xf32, #tpu.memory_space<vmem>>, vector<40x128xf32>
    %cst = arith.constant dense<0.000000e+00> : vector<128x128xf32>
    %2 = tpu.matmul %0, %1, %cst {dimension_numbers = #tpu.dot_dimension_numbers<[1], [0], [0], [1], [0, 0, 1, 1], [], []>, precision = #tpu.contract_precision<fp32>} : vector<128x40xf32>, vector<40x128xf32>, vector<128x128xf32> -> vector<128x128xf32>
    %3 = vector.extract_strided_slice %2 {offsets = [0, 0], sizes = [128, 1], strides = [1, 1]} : vector<128x128xf32> to vector<128x1xf32>
    %c0_3 = arith.constant 0 : index
    %4 = memref.load %arg3[%c0_3] : memref<1xf32, #tpu.memory_space<smem>>
    %5 = vector.broadcast %4 : f32 to vector<128x1xf32>
    %6 = arith.addf %3, %5 : vector<128x1xf32>
    %7 = arith.negf %6 : vector<128x1xf32>
    %8 = math.exp %7 : vector<128x1xf32>
    %cst_4 = arith.constant 1.000000e+00 : f32
    %9 = vector.broadcast %cst_4 : f32 to vector<128x1xf32>
    %10 = arith.addf %9, %8 : vector<128x1xf32>
    %11 = arith.divf %9, %10 : vector<128x1xf32>
    %c0_5 = arith.constant 0 : index
    %c0_6 = arith.constant 0 : index
    %12 = vector.load %arg4[%c0_5, %c0_6] : memref<128x1xf32, #tpu.memory_space<vmem>>, vector<128x1xf32>
    tpu.vector_store %arg4[%c0_5, %c0_6], %11 {strides = array<i32>} : memref<128x1xf32, #tpu.memory_space<vmem>>, vector<128x1xf32>,
    return
  }
  func.func @transform_0(%arg0: i32) -> (i32, i32) {
    %c0_i32 = arith.constant 0 : i32
    %c0_i32_0 = arith.constant 0 : i32
    return %arg0, %c0_i32 : i32, i32
  }
  func.func @transform_1(%arg0: i32) -> (i32, i32) {
    %c0_i32 = arith.constant 0 : i32
    %c0_i32_0 = arith.constant 0 : i32
    %c0_i32_1 = arith.constant 0 : i32
    return %c0_i32, %c0_i32_0 : i32, i32
  }
  func.func @transform_2(%arg0: i32) -> i32 {
    %c0_i32 = arith.constant 0 : i32
    %c0_i32_0 = arith.constant 0 : i32
    return %c0_i32 : i32
  }
  func.func @transform_3(%arg0: i32) -> (i32, i32) {
    %c0_i32 = arith.constant 0 : i32
    %c0_i32_0 = arith.constant 0 : i32
    return %arg0, %c0_i32 : i32, i32
  }
}

</mosaic_0001>

<llo_original>
// kernel: tpu_custom_call.1
$region0: #{tpu_custom_call.1}
  #allocation0 [shape = 'u32[]', space=smem, size = 0x4, offset = 0x4, fixed_abs, tag = 'smem constant byte address 0x4 - core index']
  #allocation1 [shape = 'u32[144,128]{1,0:T(1,128)}', space=vmem, size = 0x12000, scoped, tag = 'internal scratch']
  %s0 = inlined_call_operand.vmem [shape: f32[128,1], index: 0, kind: input, shape index: {}]
  %s1 = inlined_call_operand.hbm [shape: f32[1,128], index: 1, kind: output, shape index: {}]
  %s2 = sld [smem:[#allocation0]]
  $region14: #{tpu_custom_call.1} parent=0
    _
  %s4 = ssub.s32 1, %s2
  %s5 = scalar_select 0, %s4, %s2
  $region1: #{tpu_custom_call.1} parent=0
    #allocation2 [shape = 'u8[512]{0}', space=vmem, size = 0x400, scoped, tag = 'output window, operand 0, single buffered']
    #allocation3 [shape = 's32[1]{0}', space=sflag, size = 0x4, scoped, tag = 'scoped memory for tpu_custom_call.1']
    %6 = vsyncpa [#allocation3], 0
    // Predicated region
    $region2: #{tpu_custom_call.1} parent=1 // pred_check
      _
    $region3: #{tpu_custom_call.1} parent=1 // pred_check_branch
      %8 = sbr.rel (0) target = $region5
    $region4: #{tpu_custom_call.1} parent=1 // pred_region
      _
    $region5: #{tpu_custom_call.1} parent=1 // pred_fallthru
      _
    %v9 = vld [vmem:[%s0] sm:$0xff]
    %v10 = vld [vmem:[%s0 + $0x8] sm:$0xff]
    %v11 = vld [vmem:[%s0 + $0x10] sm:$0xff]
    %v12 = vld [vmem:[%s0 + $0x18] sm:$0xff]
    %v13 = vld [vmem:[%s0 + $0x20] sm:$0xff]
    %v14 = vld [vmem:[%s0 + $0x28] sm:$0xff]
    %v15 = vld [vmem:[%s0 + $0x30] sm:$0xff]
    %v16 = vld [vmem:[%s0 + $0x38] sm:$0xff]
    %v17 = vld [vmem:[%s0 + $0x40] sm:$0xff]
    %v18 = vld [vmem:[%s0 + $0x48] sm:$0xff]
    %v19 = vld [vmem:[%s0 + $0x50] sm:$0xff]
    %v20 = vld [vmem:[%s0 + $0x58] sm:$0xff]
    %v21 = vld [vmem:[%s0 + $0x60] sm:$0xff]
    %v22 = vld [vmem:[%s0 + $0x68] sm:$0xff]
    %v23 = vld [vmem:[%s0 + $0x70] sm:$0xff]
    %v24 = vld [vmem:[%s0 + $0x78] sm:$0xff]
    %41 = vset.pattern.permute.xlu0 0
    %42 = vperm.xlu0 %41, %v9
    %v43 = vpop.permute.xlu0 %42
    %44 = vset.pattern.permute.xlu0 0
    %45 = vperm.xlu0 %44, %v10
    %v46 = vpop.permute.xlu0 %45
    %47 = vset.pattern.permute.xlu0 0
    %48 = vperm.xlu0 %47, %v11
    %v49 = vpop.permute.xlu0 %48
    %50 = vset.pattern.permute.xlu0 0
    %51 = vperm.xlu0 %50, %v12
    %v52 = vpop.permute.xlu0 %51
    %53 = vset.pattern.permute.xlu0 0
    %54 = vperm.xlu0 %53, %v13
    %v55 = vpop.permute.xlu0 %54
    %56 = vset.pattern.permute.xlu0 0
    %57 = vperm.xlu0 %56, %v14
    %v58 = vpop.permute.xlu0 %57
    %59 = vset.pattern.permute.xlu0 0
    %60 = vperm.xlu0 %59, %v15
    %v61 = vpop.permute.xlu0 %60
    %62 = vset.pattern.permute.xlu0 0
    %63 = vperm.xlu0 %62, %v16
    %v64 = vpop.permute.xlu0 %63
    %65 = vset.pattern.permute.xlu0 0
    %66 = vperm.xlu0 %65, %v17
    %v67 = vpop.permute.xlu0 %66
    %68 = vset.pattern.permute.xlu0 0
    %69 = vperm.xlu0 %68, %v18
    %v70 = vpop.permute.xlu0 %69
    %71 = vset.pattern.permute.xlu0 0
    %72 = vperm.xlu0 %71, %v19
    %v73 = vpop.permute.xlu0 %72
    %74 = vset.pattern.permute.xlu0 0
    %75 = vperm.xlu0 %74, %v20
    %v76 = vpop.permute.xlu0 %75
    %77 = vset.pattern.permute.xlu0 0
    %78 = vperm.xlu0 %77, %v21
    %v79 = vpop.permute.xlu0 %78
    %80 = vset.pattern.permute.xlu0 0
    %81 = vperm.xlu0 %80, %v22
    %v82 = vpop.permute.xlu0 %81
    %83 = vset.pattern.permute.xlu0 0
    %84 = vperm.xlu0 %83, %v23
    %v85 = vpop.permute.xlu0 %84
    %86 = vset.pattern.permute.xlu0 0
    %87 = vperm.xlu0 %86, %v24
    %v88 = vpop.permute.xlu0 %87
    %v89 = vlaneseq
    %v90 = vand.u32 %v89, 127
    %v91 = vlaneseq
    %v92 = vshrl.u32 %v91, 7
    %v93 = vsub.s32 %v90, %v92
    %v94 = vrot.slane %v43, %v93
    %v95 = vadd.s32 %v90, 4294967288
    %v96 = vlaneseq
    %v97 = vshrl.u32 %v96, 7
    %v98 = vsub.s32 %v95, %v97
    %v99 = vrot.slane %v46, %v98
    %vm100 = vcmask 130112
    %v101 = vsel %vm100, %v99, %v94
    %v102 = vadd.s32 %v90, 4294967280
    %v103 = vlaneseq
    %v104 = vshrl.u32 %v103, 7
    %v105 = vsub.s32 %v102, %v104
    %v106 = vrot.slane %v49, %v105
    %vm107 = vcmask 195712
    %v108 = vsel %vm107, %v106, %v101
    %v109 = vadd.s32 %v90, 4294967272
    %v110 = vlaneseq
    %v111 = vshrl.u32 %v110, 7
    %v112 = vsub.s32 %v109, %v111
    %v113 = vrot.slane %v52, %v112
    %vm114 = vcmask 261312
    %v115 = vsel %vm114, %v113, %v108
    %v116 = vadd.s32 %v90, 4294967264
    %v117 = vlaneseq
    %v118 = vshrl.u32 %v117, 7
    %v119 = vsub.s32 %v116, %v118
    %v120 = vrot.slane %v55, %v119
    %vm121 = vcmask 326912
    %v122 = vsel %vm121, %v120, %v115
    %v123 = vadd.s32 %v90, 4294967256
    %v124 = vlaneseq
    %v125 = vshrl.u32 %v124, 7
    %v126 = vsub.s32 %v123, %v125
    %v127 = vrot.slane %v58, %v126
    %vm128 = vcmask 392512
    %v129 = vsel %vm128, %v127, %v122
    %v130 = vadd.s32 %v90, 4294967248
    %v131 = vlaneseq
    %v132 = vshrl.u32 %v131, 7
    %v133 = vsub.s32 %v130, %v132
    %v134 = vrot.slane %v61, %v133
    %vm135 = vcmask 458112
    %v136 = vsel %vm135, %v134, %v129
    %v137 = vadd.s32 %v90, 4294967240
    %v138 = vlaneseq
    %v139 = vshrl.u32 %v138, 7
    %v140 = vsub.s32 %v137, %v139
    %v141 = vrot.slane %v64, %v140
    %vm142 = vcmask 523712
    %v143 = vsel %vm142, %v141, %v136
    %v144 = vadd.s32 %v90, 4294967232
    %v145 = vlaneseq
    %v146 = vshrl.u32 %v145, 7
    %v147 = vsub.s32 %v144, %v146
    %v148 = vrot.slane %v67, %v147
    %vm149 = vcmask 589312
    %v150 = vsel %vm149, %v148, %v143
    %v151 = vadd.s32 %v90, 4294967224
    %v152 = vlaneseq
    %v153 = vshrl.u32 %v152, 7
    %v154 = vsub.s32 %v151, %v153
    %v155 = vrot.slane %v70, %v154
    %vm156 = vcmask 654912
    %v157 = vsel %vm156, %v155, %v150
    %v158 = vadd.s32 %v90, 4294967216
    %v159 = vlaneseq
    %v160 = vshrl.u32 %v159, 7
    %v161 = vsub.s32 %v158, %v160
    %v162 = vrot.slane %v73, %v161
    %vm163 = vcmask 720512
    %v164 = vsel %vm163, %v162, %v157
    %v165 = vadd.s32 %v90, 4294967208
    %v166 = vlaneseq
    %v167 = vshrl.u32 %v166, 7
    %v168 = vsub.s32 %v165, %v167
    %v169 = vrot.slane %v76, %v168
    %vm170 = vcmask 786112
    %v171 = vsel %vm170, %v169, %v164
    %v172 = vadd.s32 %v90, 4294967200
    %v173 = vlaneseq
    %v174 = vshrl.u32 %v173, 7
    %v175 = vsub.s32 %v172, %v174
    %v176 = vrot.slane %v79, %v175
    %vm177 = vcmask 851712
    %v178 = vsel %vm177, %v176, %v171
    %v179 = vadd.s32 %v90, 4294967192
    %v180 = vlaneseq
    %v181 = vshrl.u32 %v180, 7
    %v182 = vsub.s32 %v179, %v181
    %v183 = vrot.slane %v82, %v182
    %vm184 = vcmask 917312
    %v185 = vsel %vm184, %v183, %v178
    %v186 = vadd.s32 %v90, 4294967184
    %v187 = vlaneseq
    %v188 = vshrl.u32 %v187, 7
    %v189 = vsub.s32 %v186, %v188
    %v190 = vrot.slane %v85, %v189
    %vm191 = vcmask 982912
    %v192 = vsel %vm191, %v190, %v185
    %v193 = vadd.s32 %v90, 4294967176
    %v194 = vlaneseq
    %v195 = vshrl.u32 %v194, 7
    %v196 = vsub.s32 %v193, %v195
    %v197 = vrot.slane %v88, %v196
    %vm198 = vcmask 1048512
    %v199 = vsel %vm198, %v197, %v192
    %201 = vst [vmem:[#allocation2] sm:$0x1] %v199
    // Predicated region
    $region6: #{tpu_custom_call.1} parent=1 // pred_check
      _
    $region7: #{tpu_custom_call.1} parent=1 // pred_check_branch
      %203 = sbr.rel (0) target = $region9
    $region8: #{tpu_custom_call.1} parent=1 // pred_region
      %s205 = ssub.s32 16, 16
      %206 = vsyncadd [#allocation3], %s205
      %s208 = sshll.u32 [#allocation2], 4
      %s209 = int_to_ptr.vmem [resolvable:$true] %s208
      %211 = dma.vmem_to_hbm [thread:$0]  %s209, 16, %s1, [#allocation3]
    $region9: #{tpu_custom_call.1} parent=1 // pred_fallthru
      _
    // Predicated region
    $region10: #{tpu_custom_call.1} parent=1 // pred_check
      _
    $region11: #{tpu_custom_call.1} parent=1 // pred_check_branch
      %213 = sbr.rel (0) target = $region13
    $region12: #{tpu_custom_call.1} parent=1 // pred_region
      %214 = dma.done [#allocation3], 16
    $region13: #{tpu_custom_call.1} parent=1 // pred_fallthru
      _
    %215 = vsyncpa [#allocation3], 1

// kernel: tpu_custom_call.1
$region0: #{tpu_custom_call.1}
  #allocation0 [shape = 'u32[]', space=smem, size = 0x4, offset = 0x4, fixed_abs, tag = 'smem constant byte address 0x4 - core index']
  #allocation1 [shape = 'u32[144,128]{1,0:T(1,128)}', space=vmem, size = 0x12000, scoped, tag = 'internal scratch']
  #allocation2 [shape = 'f32[1]{0:T(128)S(6)}', space=smem, size = 0x200, scoped, tag = 'scoped memory for tpu_custom_call.1']
  %s0 = inlined_call_operand.vmem [shape: f32[128,40], index: 0, kind: input, shape index: {}]
  %s1 = inlined_call_operand.vmem [shape: f32[40,128], index: 1, kind: input, shape index: {}]
  %s2 = inlined_call_operand.<no memory space> [shape: f32[1], index: 2, kind: input, shape index: {}]
  %s3 = inlined_call_operand.vmem [shape: f32[128,1], index: 3, kind: output, shape index: {}]
  %s4 = sld [smem:[#allocation0]]
  $region22: #{tpu_custom_call.1} parent=0
    _
  %s6 = ssub.s32 1, %s4
  %s7 = scalar_select 0, %s6, %s4
  %8 = sst [smem:[#allocation2]] %s2
  // Predicated region
  $region2: #{tpu_custom_call.1} parent=0 // pred_check
    _
  $region3: #{tpu_custom_call.1} parent=0 // pred_check_branch
    %10 = sbr.rel (0) target = $region5
  $region4: #{tpu_custom_call.1} parent=0 // pred_region
    _
  $region5: #{tpu_custom_call.1} parent=0 // pred_fallthru
    _
  // Predicated region
  $region6: #{tpu_custom_call.1} parent=0 // pred_check
    _
  $region7: #{tpu_custom_call.1} parent=0 // pred_check_branch
    %12 = sbr.rel (0) target = $region9
  $region8: #{tpu_custom_call.1} parent=0 // pred_region
    _
  $region9: #{tpu_custom_call.1} parent=0 // pred_fallthru
    _
  // Predicated region
  $region10: #{tpu_custom_call.1} parent=0 // pred_check
    _
  $region11: #{tpu_custom_call.1} parent=0 // pred_check_branch
    %14 = sbr.rel (0) target = $region13
  $region12: #{tpu_custom_call.1} parent=0 // pred_region
    _
  $region13: #{tpu_custom_call.1} parent=0 // pred_fallthru
    _
  %v15 = vld [vmem:[%s0] sm:$0xff]
  %v16 = vld [vmem:[%s0 + $0x8] sm:$0xff]
  %v17 = vld [vmem:[%s0 + $0x10] sm:$0xff]
  %v18 = vld [vmem:[%s0 + $0x18] sm:$0xff]
  %v19 = vld [vmem:[%s0 + $0x20] sm:$0xff]
  %v20 = vld [vmem:[%s0 + $0x28] sm:$0xff]
  %v21 = vld [vmem:[%s0 + $0x30] sm:$0xff]
  %v22 = vld [vmem:[%s0 + $0x38] sm:$0xff]
  %v23 = vld [vmem:[%s0 + $0x40] sm:$0xff]
  %v24 = vld [vmem:[%s0 + $0x48] sm:$0xff]
  %v25 = vld [vmem:[%s0 + $0x50] sm:$0xff]
  %v26 = vld [vmem:[%s0 + $0x58] sm:$0xff]
  %v27 = vld [vmem:[%s0 + $0x60] sm:$0xff]
  %v28 = vld [vmem:[%s0 + $0x68] sm:$0xff]
  %v29 = vld [vmem:[%s0 + $0x70] sm:$0xff]
  %v30 = vld [vmem:[%s0 + $0x78] sm:$0xff]
  %v31 = vld [vmem:[%s1] sm:$0xff]
  %v32 = vld [vmem:[%s1 + $0x8] sm:$0xff]
  %v33 = vld [vmem:[%s1 + $0x10] sm:$0xff]
  %v34 = vld [vmem:[%s1 + $0x18] sm:$0xff]
  %v35 = vld [vmem:[%s1 + $0x20] sm:$0xff]
  %vm36 = vcmask 326656
  %v38 = vsel %vm36, %v15, 0
  %v41 = vsel %vm36, %v16, 0
  %v44 = vsel %vm36, %v17, 0
  %v47 = vsel %vm36, %v18, 0
  %v50 = vsel %vm36, %v19, 0
  %v53 = vsel %vm36, %v20, 0
  %v56 = vsel %vm36, %v21, 0
  %v59 = vsel %vm36, %v22, 0
  %v62 = vsel %vm36, %v23, 0
  %v65 = vsel %vm36, %v24, 0
  %v68 = vsel %vm36, %v25, 0
  %v71 = vsel %vm36, %v26, 0
  %v74 = vsel %vm36, %v27, 0
  %v77 = vsel %vm36, %v28, 0
  %v80 = vsel %vm36, %v29, 0
  %v83 = vsel %vm36, %v30, 0
  %85 = vmatprep.subr.mxu0 0.0
  %86 = vmatpush1.msra.mxu0 0.0
  %87 = vmatprep.subr.mxu0 0.0
  %88 = vmatpush1.msra.mxu0 0.0
  %89 = vmatprep.subr.mxu0 0.0
  %90 = vmatpush1.msra.mxu0 0.0
  %91 = vmatprep.subr.mxu0 0.0
  %92 = vmatpush1.msra.mxu0 0.0
  %93 = vmatprep.subr.mxu0 0.0
  %94 = vmatpush1.msra.mxu0 0.0
  %95 = vmatprep.subr.mxu0 0.0
  %96 = vmatpush1.msra.mxu0 0.0
  %97 = vmatprep.subr.mxu0 0.0
  %98 = vmatpush1.msra.mxu0 0.0
  %99 = vmatprep.subr.mxu0 0.0
  %100 = vmatpush1.msra.mxu0 0.0
  %101 = vmatprep.subr.mxu0 0.0
  %102 = vmatpush1.msra.mxu0 0.0
  %103 = vmatprep.subr.mxu0 0.0
  %104 = vmatpush1.msra.mxu0 0.0
  %105 = vmatprep.subr.mxu0 0.0
  %106 = vmatpush1.msra.mxu0 0.0
  %107 = vmatprep.subr.mxu0 0.0
  %v108 = vand.u32 %v35, 4294901760
  %109 = vmatpush1.msra.mxu0 %v108
  %110 = vmatprep.subr.mxu0 0.0
  %v111 = vand.u32 %v34, 4294901760
  %112 = vmatpush1.msra.mxu0 %v111
  %113 = vmatprep.subr.mxu0 0.0
  %v114 = vand.u32 %v33, 4294901760
  %115 = vmatpush1.msra.mxu0 %v114
  %116 = vmatprep.subr.mxu0 0.0
  %v117 = vand.u32 %v32, 4294901760
  %118 = vmatpush1.msra.mxu0 %v117
  %119 = vmatprep.subr.mxu0 0.0
  %v120 = vand.u32 %v31, 4294901760
  %121 = vmatpush1.msra.mxu0 %v120
  %122 = vmatprep.subr.mxu0 0.0
  %123 = vmatpush2.msra.mxu0 0.0
  %124 = vmatprep.subr.mxu0 0.0
  %125 = vmatpush2.msra.mxu0 0.0
  %126 = vmatprep.subr.mxu0 0.0
  %127 = vmatpush2.msra.mxu0 0.0
  %128 = vmatprep.subr.mxu0 0.0
  %129 = vmatpush2.msra.mxu0 0.0
  %130 = vmatprep.subr.mxu0 0.0
  %131 = vmatpush2.msra.mxu0 0.0
  %132 = vmatprep.subr.mxu0 0.0
  %133 = vmatpush2.msra.mxu0 0.0
  %134 = vmatprep.subr.mxu0 0.0
  %135 = vmatpush2.msra.mxu0 0.0
  %136 = vmatprep.subr.mxu0 0.0
  %137 = vmatpush2.msra.mxu0 0.0
  %138 = vmatprep.subr.mxu0 0.0
  %139 = vmatpush2.msra.mxu0 0.0
  %140 = vmatprep.subr.mxu0 0.0
  %141 = vmatpush2.msra.mxu0 0.0
  %142 = vmatprep.subr.mxu0 0.0
  %143 = vmatpush2.msra.mxu0 0.0
  %144 = vmatprep.subr.mxu0 0.0
  %145 = vmatpush2.msra.mxu0 0.0
  %146 = vmatprep.subr.mxu0 0.0
  %147 = vmatpush2.msra.mxu0 0.0
  %148 = vmatprep.subr.mxu0 0.0
  %149 = vmatpush2.msra.mxu0 0.0
  %150 = vmatprep.subr.mxu0 0.0
  %151 = vmatpush2.msra.mxu0 0.0
  %152 = vmatprep.subr.mxu0 0.0
  %153 = vmatpush2.msra.mxu0 0.0
  %154 = vmatprep.mubr.f32.mxu0 0.0
  %v155 = vand.u32 %v38, 4294901760
  %v156 = vsub.f32 %v38, %v155
  %v157 = vand.u32 %v156, 4294901760
  %v158 = vsub.f32 %v156, %v157
  %v159 = vand.u32 %v158, 4294901760
  %160 = vmatmul.mubr.f32.gmra.mxu0 %v159
  %v161 = vpop.f32.mrf.mxu0
  %v162 = vadd.f32 0.0, %v161
  %v163 = vpop.f32.mrf.mxu0
  %164 = vmatprep.mubr.f32.mxu0 0.0
  %v165 = vand.u32 %v41, 4294901760
  %v166 = vsub.f32 %v41, %v165
  %v167 = vand.u32 %v166, 4294901760
  %v168 = vsub.f32 %v166, %v167
  %v169 = vand.u32 %v168, 4294901760
  %170 = vmatmul.mubr.f32.gmra.mxu0 %v169
  %v171 = vpop.f32.mrf.mxu0
  %v172 = vadd.f32 0.0, %v171
  %v173 = vpop.f32.mrf.mxu0
  %174 = vmatprep.mubr.f32.mxu0 0.0
  %v175 = vand.u32 %v44, 4294901760
  %v176 = vsub.f32 %v44, %v175
  %v177 = vand.u32 %v176, 4294901760
  %v178 = vsub.f32 %v176, %v177
  %v179 = vand.u32 %v178, 4294901760
  %180 = vmatmul.mubr.f32.gmra.mxu0 %v179
  %v181 = vpop.f32.mrf.mxu0
  %v182 = vadd.f32 0.0, %v181
  %v183 = vpop.f32.mrf.mxu0
  %184 = vmatprep.mubr.f32.mxu0 0.0
  %v185 = vand.u32 %v47, 4294901760
  %v186 = vsub.f32 %v47, %v185
  %v187 = vand.u32 %v186, 4294901760
  %v188 = vsub.f32 %v186, %v187
  %v189 = vand.u32 %v188, 4294901760
  %190 = vmatmul.mubr.f32.gmra.mxu0 %v189
  %v191 = vpop.f32.mrf.mxu0
  %v192 = vadd.f32 0.0, %v191
  %v193 = vpop.f32.mrf.mxu0
  %194 = vmatprep.mubr.f32.mxu0 0.0
  %v195 = vand.u32 %v50, 4294901760
  %v196 = vsub.f32 %v50, %v195
  %v197 = vand.u32 %v196, 4294901760
  %v198 = vsub.f32 %v196, %v197
  %v199 = vand.u32 %v198, 4294901760
  %200 = vmatmul.mubr.f32.gmra.mxu0 %v199
  %v201 = vpop.f32.mrf.mxu0
  %v202 = vadd.f32 0.0, %v201
  %v203 = vpop.f32.mrf.mxu0
  %204 = vmatprep.mubr.f32.mxu0 0.0
  %v205 = vand.u32 %v53, 4294901760
  %v206 = vsub.f32 %v53, %v205
  %v207 = vand.u32 %v206, 4294901760
  %v208 = vsub.f32 %v206, %v207
  %v209 = vand.u32 %v208, 4294901760
  %210 = vmatmul.mubr.f32.gmra.mxu0 %v209
  %v211 = vpop.f32.mrf.mxu0
  %v212 = vadd.f32 0.0, %v211
  %v213 = vpop.f32.mrf.mxu0
  %214 = vmatprep.mubr.f32.mxu0 0.0
  %v215 = vand.u32 %v56, 4294901760
  %v216 = vsub.f32 %v56, %v215
  %v217 = vand.u32 %v216, 4294901760
  %v218 = vsub.f32 %v216, %v217
  %v219 = vand.u32 %v218, 4294901760
  %220 = vmatmul.mubr.f32.gmra.mxu0 %v219
  %v221 = vpop.f32.mrf.mxu0
  %v222 = vadd.f32 0.0, %v221
  %v223 = vpop.f32.mrf.mxu0
  %224 = vmatprep.mubr.f32.mxu0 0.0
  %v225 = vand.u32 %v59, 4294901760
  %v226 = vsub.f32 %v59, %v225
  %v227 = vand.u32 %v226, 4294901760
  %v228 = vsub.f32 %v226, %v227
  %v229 = vand.u32 %v228, 4294901760
  %230 = vmatmul.mubr.f32.gmra.mxu0 %v229
  %v231 = vpop.f32.mrf.mxu0
  %v232 = vadd.f32 0.0, %v231
  %v233 = vpop.f32.mrf.mxu0
  %234 = vmatprep.mubr.f32.mxu0 0.0
  %v235 = vand.u32 %v62, 4294901760
  %v236 = vsub.f32 %v62, %v235
  %v237 = vand.u32 %v236, 4294901760
  %v238 = vsub.f32 %v236, %v237
  %v239 = vand.u32 %v238, 4294901760
  %240 = vmatmul.mubr.f32.gmra.mxu0 %v239
  %v241 = vpop.f32.mrf.mxu0
  %v242 = vadd.f32 0.0, %v241
  %v243 = vpop.f32.mrf.mxu0
  %244 = vmatprep.mubr.f32.mxu0 0.0
  %v245 = vand.u32 %v65, 4294901760
  %v246 = vsub.f32 %v65, %v245
  %v247 = vand.u32 %v246, 4294901760
  %v248 = vsub.f32 %v246, %v247
  %v249 = vand.u32 %v248, 4294901760
  %250 = vmatmul.mubr.f32.gmra.mxu0 %v249
  %v251 = vpop.f32.mrf.mxu0
  %v252 = vadd.f32 0.0, %v251
  %v253 = vpop.f32.mrf.mxu0
  %254 = vmatprep.mubr.f32.mxu0 0.0
  %v255 = vand.u32 %v68, 4294901760
  %v256 = vsub.f32 %v68, %v255
  %v257 = vand.u32 %v256, 4294901760
  %v258 = vsub.f32 %v256, %v257
  %v259 = vand.u32 %v258, 4294901760
  %260 = vmatmul.mubr.f32.gmra.mxu0 %v259
  %v261 = vpop.f32.mrf.mxu0
  %v262 = vadd.f32 0.0, %v261
  %v263 = vpop.f32.mrf.mxu0
  %264 = vmatprep.mubr.f32.mxu0 0.0
  %v265 = vand.u32 %v71, 4294901760
  %v266 = vsub.f32 %v71, %v265
  %v267 = vand.u32 %v266, 4294901760
  %v268 = vsub.f32 %v266, %v267
  %v269 = vand.u32 %v268, 4294901760
  %270 = vmatmul.mubr.f32.gmra.mxu0 %v269
  %v271 = vpop.f32.mrf.mxu0
  %v272 = vadd.f32 0.0, %v271
  %v273 = vpop.f32.mrf.mxu0
  %274 = vmatprep.mubr.f32.mxu0 0.0
  %v275 = vand.u32 %v74, 4294901760
  %v276 = vsub.f32 %v74, %v275
  %v277 = vand.u32 %v276, 4294901760
  %v278 = vsub.f32 %v276, %v277
  %v279 = vand.u32 %v278, 4294901760
  %280 = vmatmul.mubr.f32.gmra.mxu0 %v279
  %v281 = vpop.f32.mrf.mxu0
  %v282 = vadd.f32 0.0, %v281
  %v283 = vpop.f32.mrf.mxu0
  %284 = vmatprep.mubr.f32.mxu0 0.0
  %v285 = vand.u32 %v77, 4294901760
  %v286 = vsub.f32 %v77, %v285
  %v287 = vand.u32 %v286, 4294901760
  %v288 = vsub.f32 %v286, %v287
  %v289 = vand.u32 %v288, 4294901760
  %290 = vmatmul.mubr.f32.gmra.mxu0 %v289
  %v291 = vpop.f32.mrf.mxu0
  %v292 = vadd.f32 0.0, %v291
  %v293 = vpop.f32.mrf.mxu0
  %294 = vmatprep.mubr.f32.mxu0 0.0
  %v295 = vand.u32 %v80, 4294901760
  %v296 = vsub.f32 %v80, %v295
  %v297 = vand.u32 %v296, 4294901760
  %v298 = vsub.f32 %v296, %v297
  %v299 = vand.u32 %v298, 4294901760
  %300 = vmatmul.mubr.f32.gmra.mxu0 %v299
  %v301 = vpop.f32.mrf.mxu0
  %v302 = vadd.f32 0.0, %v301
  %v303 = vpop.f32.mrf.mxu0
  %304 = vmatprep.mubr.f32.mxu0 0.0
  %v305 = vand.u32 %v83, 4294901760
  %v306 = vsub.f32 %v83, %v305
  %v307 = vand.u32 %v306, 4294901760
  %v308 = vsub.f32 %v306, %v307
  %v309 = vand.u32 %v308, 4294901760
  %310 = vmatmul.mubr.f32.gmra.mxu0 %v309
  %v311 = vpop.f32.mrf.mxu0
  %v312 = vadd.f32 0.0, %v311
  %v313 = vpop.f32.mrf.mxu0
  %314 = vdwg.mxu0
  %315 = vmatprep.subr.mxu0 0.0
  %316 = vmatpush1.msra.mxu0 0.0
  %317 = vmatprep.subr.mxu0 0.0
  %318 = vmatpush1.msra.mxu0 0.0
  %319 = vmatprep.subr.mxu0 0.0
  %320 = vmatpush1.msra.mxu0 0.0
  %321 = vmatprep.subr.mxu0 0.0
  %322 = vmatpush1.msra.mxu0 0.0
  %323 = vmatprep.subr.mxu0 0.0
  %324 = vmatpush1.msra.mxu0 0.0
  %325 = vmatprep.subr.mxu0 0.0
  %326 = vmatpush1.msra.mxu0 0.0
  %327 = vmatprep.subr.mxu0 0.0
  %328 = vmatpush1.msra.mxu0 0.0
  %329 = vmatprep.subr.mxu0 0.0
  %330 = vmatpush1.msra.mxu0 0.0
  %331 = vmatprep.subr.mxu0 0.0
  %332 = vmatpush1.msra.mxu0 0.0
  %333 = vmatprep.subr.mxu0 0.0
  %334 = vmatpush1.msra.mxu0 0.0
  %335 = vmatprep.subr.mxu0 0.0
  %336 = vmatpush1.msra.mxu0 0.0
  %337 = vmatprep.subr.mxu0 0.0
  %v338 = vand.u32 %v35, 4294901760
  %v339 = vsub.f32 %v35, %v338
  %v340 = vand.u32 %v339, 4294901760
  %v341 = vsub.f32 %v339, %v340
  %v342 = vand.u32 %v341, 4294901760
  %343 = vmatpush1.msra.mxu0 %v342
  %344 = vmatprep.subr.mxu0 0.0
  %v345 = vand.u32 %v34, 4294901760
  %v346 = vsub.f32 %v34, %v345
  %v347 = vand.u32 %v346, 4294901760
  %v348 = vsub.f32 %v346, %v347
  %v349 = vand.u32 %v348, 4294901760
  %350 = vmatpush1.msra.mxu0 %v349
  %351 = vmatprep.subr.mxu0 0.0
  %v352 = vand.u32 %v33, 4294901760
  %v353 = vsub.f32 %v33, %v352
  %v354 = vand.u32 %v353, 4294901760
  %v355 = vsub.f32 %v353, %v354
  %v356 = vand.u32 %v355, 4294901760
  %357 = vmatpush1.msra.mxu0 %v356
  %358 = vmatprep.subr.mxu0 0.0
  %v359 = vand.u32 %v32, 4294901760
  %v360 = vsub.f32 %v32, %v359
  %v361 = vand.u32 %v360, 4294901760
  %v362 = vsub.f32 %v360, %v361
  %v363 = vand.u32 %v362, 4294901760
  %364 = vmatpush1.msra.mxu0 %v363
  %365 = vmatprep.subr.mxu0 0.0
  %v366 = vand.u32 %v31, 4294901760
  %v367 = vsub.f32 %v31, %v366
  %v368 = vand.u32 %v367, 4294901760
  %v369 = vsub.f32 %v367, %v368
  %v370 = vand.u32 %v369, 4294901760
  %371 = vmatpush1.msra.mxu0 %v370
  %372 = vmatprep.subr.mxu0 0.0
  %373 = vmatpush2.msra.mxu0 0.0
  %374 = vmatprep.subr.mxu0 0.0
  %375 = vmatpush2.msra.mxu0 0.0
  %376 = vmatprep.subr.mxu0 0.0
  %377 = vmatpush2.msra.mxu0 0.0
  %378 = vmatprep.subr.mxu0 0.0
  %379 = vmatpush2.msra.mxu0 0.0
  %380 = vmatprep.subr.mxu0 0.0
  %381 = vmatpush2.msra.mxu0 0.0
  %382 = vmatprep.subr.mxu0 0.0
  %383 = vmatpush2.msra.mxu0 0.0
  %384 = vmatprep.subr.mxu0 0.0
  %385 = vmatpush2.msra.mxu0 0.0
  %386 = vmatprep.subr.mxu0 0.0
  %387 = vmatpush2.msra.mxu0 0.0
  %388 = vmatprep.subr.mxu0 0.0
  %389 = vmatpush2.msra.mxu0 0.0
  %390 = vmatprep.subr.mxu0 0.0
  %391 = vmatpush2.msra.mxu0 0.0
  %392 = vmatprep.subr.mxu0 0.0
  %393 = vmatpush2.msra.mxu0 0.0
  %394 = vmatprep.subr.mxu0 0.0
  %395 = vmatpush2.msra.mxu0 0.0
  %396 = vmatprep.subr.mxu0 0.0
  %397 = vmatpush2.msra.mxu0 0.0
  %398 = vmatprep.subr.mxu0 0.0
  %399 = vmatpush2.msra.mxu0 0.0
  %400 = vmatprep.subr.mxu0 0.0
  %401 = vmatpush2.msra.mxu0 0.0
  %402 = vmatprep.subr.mxu0 0.0
  %403 = vmatpush2.msra.mxu0 0.0
  %404 = vmatprep.mubr.f32.mxu0 0.0
  %v405 = vand.u32 %v38, 4294901760
  %406 = vmatmul.mubr.f32.gmra.mxu0 %v405
  %v407 = vpop.f32.mrf.mxu0
  %v408 = vadd.f32 %v162, %v407
  %v409 = vpop.f32.mrf.mxu0
  %410 = vmatprep.mubr.f32.mxu0 0.0
  %v411 = vand.u32 %v41, 4294901760
  %412 = vmatmul.mubr.f32.gmra.mxu0 %v411
  %v413 = vpop.f32.mrf.mxu0
  %v414 = vadd.f32 %v172, %v413
  %v415 = vpop.f32.mrf.mxu0
  %416 = vmatprep.mubr.f32.mxu0 0.0
  %v417 = vand.u32 %v44, 4294901760
  %418 = vmatmul.mubr.f32.gmra.mxu0 %v417
  %v419 = vpop.f32.mrf.mxu0
  %v420 = vadd.f32 %v182, %v419
  %v421 = vpop.f32.mrf.mxu0
  %422 = vmatprep.mubr.f32.mxu0 0.0
  %v423 = vand.u32 %v47, 4294901760
  %424 = vmatmul.mubr.f32.gmra.mxu0 %v423
  %v425 = vpop.f32.mrf.mxu0
  %v426 = vadd.f32 %v192, %v425
  %v427 = vpop.f32.mrf.mxu0
  %428 = vmatprep.mubr.f32.mxu0 0.0
  %v429 = vand.u32 %v50, 4294901760
  %430 = vmatmul.mubr.f32.gmra.mxu0 %v429
  %v431 = vpop.f32.mrf.mxu0
  %v432 = vadd.f32 %v202, %v431
  %v433 = vpop.f32.mrf.mxu0
  %434 = vmatprep.mubr.f32.mxu0 0.0
  %v435 = vand.u32 %v53, 4294901760
  %436 = vmatmul.mubr.f32.gmra.mxu0 %v435
  %v437 = vpop.f32.mrf.mxu0
  %v438 = vadd.f32 %v212, %v437
  %v439 = vpop.f32.mrf.mxu0
  %440 = vmatprep.mubr.f32.mxu0 0.0
  %v441 = vand.u32 %v56, 4294901760
  %442 = vmatmul.mubr.f32.gmra.mxu0 %v441
  %v443 = vpop.f32.mrf.mxu0
  %v444 = vadd.f32 %v222, %v443
  %v445 = vpop.f32.mrf.mxu0
  %446 = vmatprep.mubr.f32.mxu0 0.0
  %v447 = vand.u32 %v59, 4294901760
  %448 = vmatmul.mubr.f32.gmra.mxu0 %v447
  %v449 = vpop.f32.mrf.mxu0
  %v450 = vadd.f32 %v232, %v449
  %v451 = vpop.f32.mrf.mxu0
  %452 = vmatprep.mubr.f32.mxu0 0.0
  %v453 = vand.u32 %v62, 4294901760
  %454 = vmatmul.mubr.f32.gmra.mxu0 %v453
  %v455 = vpop.f32.mrf.mxu0
  %v456 = vadd.f32 %v242, %v455
  %v457 = vpop.f32.mrf.mxu0
  %458 = vmatprep.mubr.f32.mxu0 0.0
  %v459 = vand.u32 %v65, 4294901760
  %460 = vmatmul.mubr.f32.gmra.mxu0 %v459
  %v461 = vpop.f32.mrf.mxu0
  %v462 = vadd.f32 %v252, %v461
  %v463 = vpop.f32.mrf.mxu0
  %464 = vmatprep.mubr.f32.mxu0 0.0
  %v465 = vand.u32 %v68, 4294901760
  %466 = vmatmul.mubr.f32.gmra.mxu0 %v465
  %v467 = vpop.f32.mrf.mxu0
  %v468 = vadd.f32 %v262, %v467
  %v469 = vpop.f32.mrf.mxu0
  %470 = vmatprep.mubr.f32.mxu0 0.0
  %v471 = vand.u32 %v71, 4294901760
  %472 = vmatmul.mubr.f32.gmra.mxu0 %v471
  %v473 = vpop.f32.mrf.mxu0
  %v474 = vadd.f32 %v272, %v473
  %v475 = vpop.f32.mrf.mxu0
  %476 = vmatprep.mubr.f32.mxu0 0.0
  %v477 = vand.u32 %v74, 4294901760
  %478 = vmatmul.mubr.f32.gmra.mxu0 %v477
  %v479 = vpop.f32.mrf.mxu0
  %v480 = vadd.f32 %v282, %v479
  %v481 = vpop.f32.mrf.mxu0
  %482 = vmatprep.mubr.f32.mxu0 0.0
  %v483 = vand.u32 %v77, 4294901760
  %484 = vmatmul.mubr.f32.gmra.mxu0 %v483
  %v485 = vpop.f32.mrf.mxu0
  %v486 = vadd.f32 %v292, %v485
  %v487 = vpop.f32.mrf.mxu0
  %488 = vmatprep.mubr.f32.mxu0 0.0
  %v489 = vand.u32 %v80, 4294901760
  %490 = vmatmul.mubr.f32.gmra.mxu0 %v489
  %v491 = vpop.f32.mrf.mxu0
  %v492 = vadd.f32 %v302, %v491
  %v493 = vpop.f32.mrf.mxu0
  %494 = vmatprep.mubr.f32.mxu0 0.0
  %v495 = vand.u32 %v83, 4294901760
  %496 = vmatmul.mubr.f32.gmra.mxu0 %v495
  %v497 = vpop.f32.mrf.mxu0
  %v498 = vadd.f32 %v312, %v497
  %v499 = vpop.f32.mrf.mxu0
  %500 = vdwg.mxu0
  %501 = vmatprep.subr.mxu0 0.0
  %502 = vmatpush1.msra.mxu0 0.0
  %503 = vmatprep.subr.mxu0 0.0
  %504 = vmatpush1.msra.mxu0 0.0
  %505 = vmatprep.subr.mxu0 0.0
  %506 = vmatpush1.msra.mxu0 0.0
  %507 = vmatprep.subr.mxu0 0.0
  %508 = vmatpush1.msra.mxu0 0.0
  %509 = vmatprep.subr.mxu0 0.0
  %510 = vmatpush1.msra.mxu0 0.0
  %511 = vmatprep.subr.mxu0 0.0
  %512 = vmatpush1.msra.mxu0 0.0
  %513 = vmatprep.subr.mxu0 0.0
  %514 = vmatpush1.msra.mxu0 0.0
  %515 = vmatprep.subr.mxu0 0.0
  %516 = vmatpush1.msra.mxu0 0.0
  %517 = vmatprep.subr.mxu0 0.0
  %518 = vmatpush1.msra.mxu0 0.0
  %519 = vmatprep.subr.mxu0 0.0
  %520 = vmatpush1.msra.mxu0 0.0
  %521 = vmatprep.subr.mxu0 0.0
  %522 = vmatpush1.msra.mxu0 0.0
  %523 = vmatprep.subr.mxu0 0.0
  %v524 = vand.u32 %v35, 4294901760
  %v525 = vsub.f32 %v35, %v524
  %526 = vmatpush1.msra.mxu0 %v525
  %527 = vmatprep.subr.mxu0 0.0
  %v528 = vand.u32 %v34, 4294901760
  %v529 = vsub.f32 %v34, %v528
  %530 = vmatpush1.msra.mxu0 %v529
  %531 = vmatprep.subr.mxu0 0.0
  %v532 = vand.u32 %v33, 4294901760
  %v533 = vsub.f32 %v33, %v532
  %534 = vmatpush1.msra.mxu0 %v533
  %535 = vmatprep.subr.mxu0 0.0
  %v536 = vand.u32 %v32, 4294901760
  %v537 = vsub.f32 %v32, %v536
  %538 = vmatpush1.msra.mxu0 %v537
  %539 = vmatprep.subr.mxu0 0.0
  %v540 = vand.u32 %v31, 4294901760
  %v541 = vsub.f32 %v31, %v540
  %542 = vmatpush1.msra.mxu0 %v541
  %543 = vmatprep.subr.mxu0 0.0
  %544 = vmatpush2.msra.mxu0 0.0
  %545 = vmatprep.subr.mxu0 0.0
  %546 = vmatpush2.msra.mxu0 0.0
  %547 = vmatprep.subr.mxu0 0.0
  %548 = vmatpush2.msra.mxu0 0.0
  %549 = vmatprep.subr.mxu0 0.0
  %550 = vmatpush2.msra.mxu0 0.0
  %551 = vmatprep.subr.mxu0 0.0
  %552 = vmatpush2.msra.mxu0 0.0
  %553 = vmatprep.subr.mxu0 0.0
  %554 = vmatpush2.msra.mxu0 0.0
  %555 = vmatprep.subr.mxu0 0.0
  %556 = vmatpush2.msra.mxu0 0.0
  %557 = vmatprep.subr.mxu0 0.0
  %558 = vmatpush2.msra.mxu0 0.0
  %559 = vmatprep.subr.mxu0 0.0
  %560 = vmatpush2.msra.mxu0 0.0
  %561 = vmatprep.subr.mxu0 0.0
  %562 = vmatpush2.msra.mxu0 0.0
  %563 = vmatprep.subr.mxu0 0.0
  %564 = vmatpush2.msra.mxu0 0.0
  %565 = vmatprep.subr.mxu0 0.0
  %566 = vmatpush2.msra.mxu0 0.0
  %567 = vmatprep.subr.mxu0 0.0
  %568 = vmatpush2.msra.mxu0 0.0
  %569 = vmatprep.subr.mxu0 0.0
  %570 = vmatpush2.msra.mxu0 0.0
  %571 = vmatprep.subr.mxu0 0.0
  %572 = vmatpush2.msra.mxu0 0.0
  %573 = vmatprep.subr.mxu0 0.0
  %574 = vmatpush2.msra.mxu0 0.0
  %575 = vmatprep.mubr.f32.mxu0 0.0
  %v576 = vand.u32 %v38, 4294901760
  %v577 = vsub.f32 %v38, %v576
  %578 = vmatmul.mubr.f32.gmra.mxu0 %v577
  %v579 = vpop.f32.mrf.mxu0
  %v580 = vadd.f32 %v408, %v579
  %v581 = vpop.f32.mrf.mxu0
  %582 = vmatprep.mubr.f32.mxu0 0.0
  %v583 = vand.u32 %v41, 4294901760
  %v584 = vsub.f32 %v41, %v583
  %585 = vmatmul.mubr.f32.gmra.mxu0 %v584
  %v586 = vpop.f32.mrf.mxu0
  %v587 = vadd.f32 %v414, %v586
  %v588 = vpop.f32.mrf.mxu0
  %589 = vmatprep.mubr.f32.mxu0 0.0
  %v590 = vand.u32 %v44, 4294901760
  %v591 = vsub.f32 %v44, %v590
  %592 = vmatmul.mubr.f32.gmra.mxu0 %v591
  %v593 = vpop.f32.mrf.mxu0
  %v594 = vadd.f32 %v420, %v593
  %v595 = vpop.f32.mrf.mxu0
  %596 = vmatprep.mubr.f32.mxu0 0.0
  %v597 = vand.u32 %v47, 4294901760
  %v598 = vsub.f32 %v47, %v597
  %599 = vmatmul.mubr.f32.gmra.mxu0 %v598
  %v600 = vpop.f32.mrf.mxu0
  %v601 = vadd.f32 %v426, %v600
  %v602 = vpop.f32.mrf.mxu0
  %603 = vmatprep.mubr.f32.mxu0 0.0
  %v604 = vand.u32 %v50, 4294901760
  %v605 = vsub.f32 %v50, %v604
  %606 = vmatmul.mubr.f32.gmra.mxu0 %v605
  %v607 = vpop.f32.mrf.mxu0
  %v608 = vadd.f32 %v432, %v607
  %v609 = vpop.f32.mrf.mxu0
  %610 = vmatprep.mubr.f32.mxu0 0.0
  %v611 = vand.u32 %v53, 4294901760
  %v612 = vsub.f32 %v53, %v611
  %613 = vmatmul.mubr.f32.gmra.mxu0 %v612
  %v614 = vpop.f32.mrf.mxu0
  %v615 = vadd.f32 %v438, %v614
  %v616 = vpop.f32.mrf.mxu0
  %617 = vmatprep.mubr.f32.mxu0 0.0
  %v618 = vand.u32 %v56, 4294901760
  %v619 = vsub.f32 %v56, %v618
  %620 = vmatmul.mubr.f32.gmra.mxu0 %v619
  %v621 = vpop.f32.mrf.mxu0
  %v622 = vadd.f32 %v444, %v621
  %v623 = vpop.f32.mrf.mxu0
  %624 = vmatprep.mubr.f32.mxu0 0.0
  %v625 = vand.u32 %v59, 4294901760
  %v626 = vsub.f32 %v59, %v625
  %627 = vmatmul.mubr.f32.gmra.mxu0 %v626
  %v628 = vpop.f32.mrf.mxu0
  %v629 = vadd.f32 %v450, %v628
  %v630 = vpop.f32.mrf.mxu0
  %631 = vmatprep.mubr.f32.mxu0 0.0
  %v632 = vand.u32 %v62, 4294901760
  %v633 = vsub.f32 %v62, %v632
  %634 = vmatmul.mubr.f32.gmra.mxu0 %v633
  %v635 = vpop.f32.mrf.mxu0
  %v636 = vadd.f32 %v456, %v635
  %v637 = vpop.f32.mrf.mxu0
  %638 = vmatprep.mubr.f32.mxu0 0.0
  %v639 = vand.u32 %v65, 4294901760
  %v640 = vsub.f32 %v65, %v639
  %641 = vmatmul.mubr.f32.gmra.mxu0 %v640
  %v642 = vpop.f32.mrf.mxu0
  %v643 = vadd.f32 %v462, %v642
  %v644 = vpop.f32.mrf.mxu0
  %645 = vmatprep.mubr.f32.mxu0 0.0
  %v646 = vand.u32 %v68, 4294901760
  %v647 = vsub.f32 %v68, %v646
  %648 = vmatmul.mubr.f32.gmra.mxu0 %v647
  %v649 = vpop.f32.mrf.mxu0
  %v650 = vadd.f32 %v468, %v649
  %v651 = vpop.f32.mrf.mxu0
  %652 = vmatprep.mubr.f32.mxu0 0.0
  %v653 = vand.u32 %v71, 4294901760
  %v654 = vsub.f32 %v71, %v653
  %655 = vmatmul.mubr.f32.gmra.mxu0 %v654
  %v656 = vpop.f32.mrf.mxu0
  %v657 = vadd.f32 %v474, %v656
  %v658 = vpop.f32.mrf.mxu0
  %659 = vmatprep.mubr.f32.mxu0 0.0
  %v660 = vand.u32 %v74, 4294901760
  %v661 = vsub.f32 %v74, %v660
  %662 = vmatmul.mubr.f32.gmra.mxu0 %v661
  %v663 = vpop.f32.mrf.mxu0
  %v664 = vadd.f32 %v480, %v663
  %v665 = vpop.f32.mrf.mxu0
  %666 = vmatprep.mubr.f32.mxu0 0.0
  %v667 = vand.u32 %v77, 4294901760
  %v668 = vsub.f32 %v77, %v667
  %669 = vmatmul.mubr.f32.gmra.mxu0 %v668
  %v670 = vpop.f32.mrf.mxu0
  %v671 = vadd.f32 %v486, %v670
  %v672 = vpop.f32.mrf.mxu0
  %673 = vmatprep.mubr.f32.mxu0 0.0
  %v674 = vand.u32 %v80, 4294901760
  %v675 = vsub.f32 %v80, %v674
  %676 = vmatmul.mubr.f32.gmra.mxu0 %v675
  %v677 = vpop.f32.mrf.mxu0
  %v678 = vadd.f32 %v492, %v677
  %v679 = vpop.f32.mrf.mxu0
  %680 = vmatprep.mubr.f32.mxu0 0.0
  %v681 = vand.u32 %v83, 4294901760
  %v682 = vsub.f32 %v83, %v681
  %683 = vmatmul.mubr.f32.gmra.mxu0 %v682
  %v684 = vpop.f32.mrf.mxu0
  %v685 = vadd.f32 %v498, %v684
  %v686 = vpop.f32.mrf.mxu0
  %687 = vdwg.mxu0
  %688 = vmatprep.subr.mxu0 0.0
  %689 = vmatpush1.msra.mxu0 0.0
  %690 = vmatprep.subr.mxu0 0.0
  %691 = vmatpush1.msra.mxu0 0.0
  %692 = vmatprep.subr.mxu0 0.0
  %693 = vmatpush1.msra.mxu0 0.0
  %694 = vmatprep.subr.mxu0 0.0
  %695 = vmatpush1.msra.mxu0 0.0
  %696 = vmatprep.subr.mxu0 0.0
  %697 = vmatpush1.msra.mxu0 0.0
  %698 = vmatprep.subr.mxu0 0.0
  %699 = vmatpush1.msra.mxu0 0.0
  %700 = vmatprep.subr.mxu0 0.0
  %701 = vmatpush1.msra.mxu0 0.0
  %702 = vmatprep.subr.mxu0 0.0
  %703 = vmatpush1.msra.mxu0 0.0
  %704 = vmatprep.subr.mxu0 0.0
  %705 = vmatpush1.msra.mxu0 0.0
  %706 = vmatprep.subr.mxu0 0.0
  %707 = vmatpush1.msra.mxu0 0.0
  %708 = vmatprep.subr.mxu0 0.0
  %709 = vmatpush1.msra.mxu0 0.0
  %710 = vmatprep.subr.mxu0 0.0
  %v711 = vand.u32 %v35, 4294901760
  %712 = vmatpush1.msra.mxu0 %v711
  %713 = vmatprep.subr.mxu0 0.0
  %v714 = vand.u32 %v34, 4294901760
  %715 = vmatpush1.msra.mxu0 %v714
  %716 = vmatprep.subr.mxu0 0.0
  %v717 = vand.u32 %v33, 4294901760
  %718 = vmatpush1.msra.mxu0 %v717
  %719 = vmatprep.subr.mxu0 0.0
  %v720 = vand.u32 %v32, 4294901760
  %721 = vmatpush1.msra.mxu0 %v720
  %722 = vmatprep.subr.mxu0 0.0
  %v723 = vand.u32 %v31, 4294901760
  %724 = vmatpush1.msra.mxu0 %v723
  %725 = vmatprep.subr.mxu0 0.0
  %726 = vmatpush2.msra.mxu0 0.0
  %727 = vmatprep.subr.mxu0 0.0
  %728 = vmatpush2.msra.mxu0 0.0
  %729 = vmatprep.subr.mxu0 0.0
  %730 = vmatpush2.msra.mxu0 0.0
  %731 = vmatprep.subr.mxu0 0.0
  %732 = vmatpush2.msra.mxu0 0.0
  %733 = vmatprep.subr.mxu0 0.0
  %734 = vmatpush2.msra.mxu0 0.0
  %735 = vmatprep.subr.mxu0 0.0
  %736 = vmatpush2.msra.mxu0 0.0
  %737 = vmatprep.subr.mxu0 0.0
  %738 = vmatpush2.msra.mxu0 0.0
  %739 = vmatprep.subr.mxu0 0.0
  %740 = vmatpush2.msra.mxu0 0.0
  %741 = vmatprep.subr.mxu0 0.0
  %742 = vmatpush2.msra.mxu0 0.0
  %743 = vmatprep.subr.mxu0 0.0
  %744 = vmatpush2.msra.mxu0 0.0
  %745 = vmatprep.subr.mxu0 0.0
  %746 = vmatpush2.msra.mxu0 0.0
  %747 = vmatprep.subr.mxu0 0.0
  %748 = vmatpush2.msra.mxu0 0.0
  %749 = vmatprep.subr.mxu0 0.0
  %750 = vmatpush2.msra.mxu0 0.0
  %751 = vmatprep.subr.mxu0 0.0
  %752 = vmatpush2.msra.mxu0 0.0
  %753 = vmatprep.subr.mxu0 0.0
  %754 = vmatpush2.msra.mxu0 0.0
  %755 = vmatprep.subr.mxu0 0.0
  %756 = vmatpush2.msra.mxu0 0.0
  %757 = vmatprep.mubr.f32.mxu0 0.0
  %v758 = vand.u32 %v38, 4294901760
  %v759 = vsub.f32 %v38, %v758
  %v760 = vand.u32 %v759, 4294901760
  %761 = vmatmul.mubr.f32.gmra.mxu0 %v760
  %v762 = vpop.f32.mrf.mxu0
  %v763 = vadd.f32 %v580, %v762
  %v764 = vpop.f32.mrf.mxu0
  %765 = vmatprep.mubr.f32.mxu0 0.0
  %v766 = vand.u32 %v41, 4294901760
  %v767 = vsub.f32 %v41, %v766
  %v768 = vand.u32 %v767, 4294901760
  %769 = vmatmul.mubr.f32.gmra.mxu0 %v768
  %v770 = vpop.f32.mrf.mxu0
  %v771 = vadd.f32 %v587, %v770
  %v772 = vpop.f32.mrf.mxu0
  %773 = vmatprep.mubr.f32.mxu0 0.0
  %v774 = vand.u32 %v44, 4294901760
  %v775 = vsub.f32 %v44, %v774
  %v776 = vand.u32 %v775, 4294901760
  %777 = vmatmul.mubr.f32.gmra.mxu0 %v776
  %v778 = vpop.f32.mrf.mxu0
  %v779 = vadd.f32 %v594, %v778
  %v780 = vpop.f32.mrf.mxu0
  %781 = vmatprep.mubr.f32.mxu0 0.0
  %v782 = vand.u32 %v47, 4294901760
  %v783 = vsub.f32 %v47, %v782
  %v784 = vand.u32 %v783, 4294901760
  %785 = vmatmul.mubr.f32.gmra.mxu0 %v784
  %v786 = vpop.f32.mrf.mxu0
  %v787 = vadd.f32 %v601, %v786
  %v788 = vpop.f32.mrf.mxu0
  %789 = vmatprep.mubr.f32.mxu0 0.0
  %v790 = vand.u32 %v50, 4294901760
  %v791 = vsub.f32 %v50, %v790
  %v792 = vand.u32 %v791, 4294901760
  %793 = vmatmul.mubr.f32.gmra.mxu0 %v792
  %v794 = vpop.f32.mrf.mxu0
  %v795 = vadd.f32 %v608, %v794
  %v796 = vpop.f32.mrf.mxu0
  %797 = vmatprep.mubr.f32.mxu0 0.0
  %v798 = vand.u32 %v53, 4294901760
  %v799 = vsub.f32 %v53, %v798
  %v800 = vand.u32 %v799, 4294901760
  %801 = vmatmul.mubr.f32.gmra.mxu0 %v800
  %v802 = vpop.f32.mrf.mxu0
  %v803 = vadd.f32 %v615, %v802
  %v804 = vpop.f32.mrf.mxu0
  %805 = vmatprep.mubr.f32.mxu0 0.0
  %v806 = vand.u32 %v56, 4294901760
  %v807 = vsub.f32 %v56, %v806
  %v808 = vand.u32 %v807, 4294901760
  %809 = vmatmul.mubr.f32.gmra.mxu0 %v808
  %v810 = vpop.f32.mrf.mxu0
  %v811 = vadd.f32 %v622, %v810
  %v812 = vpop.f32.mrf.mxu0
  %813 = vmatprep.mubr.f32.mxu0 0.0
  %v814 = vand.u32 %v59, 4294901760
  %v815 = vsub.f32 %v59, %v814
  %v816 = vand.u32 %v815, 4294901760
  %817 = vmatmul.mubr.f32.gmra.mxu0 %v816
  %v818 = vpop.f32.mrf.mxu0
  %v819 = vadd.f32 %v629, %v818
  %v820 = vpop.f32.mrf.mxu0
  %821 = vmatprep.mubr.f32.mxu0 0.0
  %v822 = vand.u32 %v62, 4294901760
  %v823 = vsub.f32 %v62, %v822
  %v824 = vand.u32 %v823, 4294901760
  %825 = vmatmul.mubr.f32.gmra.mxu0 %v824
  %v826 = vpop.f32.mrf.mxu0
  %v827 = vadd.f32 %v636, %v826
  %v828 = vpop.f32.mrf.mxu0
  %829 = vmatprep.mubr.f32.mxu0 0.0
  %v830 = vand.u32 %v65, 4294901760
  %v831 = vsub.f32 %v65, %v830
  %v832 = vand.u32 %v831, 4294901760
  %833 = vmatmul.mubr.f32.gmra.mxu0 %v832
  %v834 = vpop.f32.mrf.mxu0
  %v835 = vadd.f32 %v643, %v834
  %v836 = vpop.f32.mrf.mxu0
  %837 = vmatprep.mubr.f32.mxu0 0.0
  %v838 = vand.u32 %v68, 4294901760
  %v839 = vsub.f32 %v68, %v838
  %v840 = vand.u32 %v839, 4294901760
  %841 = vmatmul.mubr.f32.gmra.mxu0 %v840
  %v842 = vpop.f32.mrf.mxu0
  %v843 = vadd.f32 %v650, %v842
  %v844 = vpop.f32.mrf.mxu0
  %845 = vmatprep.mubr.f32.mxu0 0.0
  %v846 = vand.u32 %v71, 4294901760
  %v847 = vsub.f32 %v71, %v846
  %v848 = vand.u32 %v847, 4294901760
  %849 = vmatmul.mubr.f32.gmra.mxu0 %v848
  %v850 = vpop.f32.mrf.mxu0
  %v851 = vadd.f32 %v657, %v850
  %v852 = vpop.f32.mrf.mxu0
  %853 = vmatprep.mubr.f32.mxu0 0.0
  %v854 = vand.u32 %v74, 4294901760
  %v855 = vsub.f32 %v74, %v854
  %v856 = vand.u32 %v855, 4294901760
  %857 = vmatmul.mubr.f32.gmra.mxu0 %v856
  %v858 = vpop.f32.mrf.mxu0
  %v859 = vadd.f32 %v664, %v858
  %v860 = vpop.f32.mrf.mxu0
  %861 = vmatprep.mubr.f32.mxu0 0.0
  %v862 = vand.u32 %v77, 4294901760
  %v863 = vsub.f32 %v77, %v862
  %v864 = vand.u32 %v863, 4294901760
  %865 = vmatmul.mubr.f32.gmra.mxu0 %v864
  %v866 = vpop.f32.mrf.mxu0
  %v867 = vadd.f32 %v671, %v866
  %v868 = vpop.f32.mrf.mxu0
  %869 = vmatprep.mubr.f32.mxu0 0.0
  %v870 = vand.u32 %v80, 4294901760
  %v871 = vsub.f32 %v80, %v870
  %v872 = vand.u32 %v871, 4294901760
  %873 = vmatmul.mubr.f32.gmra.mxu0 %v872
  %v874 = vpop.f32.mrf.mxu0
  %v875 = vadd.f32 %v678, %v874
  %v876 = vpop.f32.mrf.mxu0
  %877 = vmatprep.mubr.f32.mxu0 0.0
  %v878 = vand.u32 %v83, 4294901760
  %v879 = vsub.f32 %v83, %v878
  %v880 = vand.u32 %v879, 4294901760
  %881 = vmatmul.mubr.f32.gmra.mxu0 %v880
  %v882 = vpop.f32.mrf.mxu0
  %v883 = vadd.f32 %v685, %v882
  %v884 = vpop.f32.mrf.mxu0
  %885 = vdwg.mxu0
  %886 = vmatprep.subr.mxu0 0.0
  %887 = vmatpush1.msra.mxu0 0.0
  %888 = vmatprep.subr.mxu0 0.0
  %889 = vmatpush1.msra.mxu0 0.0
  %890 = vmatprep.subr.mxu0 0.0
  %891 = vmatpush1.msra.mxu0 0.0
  %892 = vmatprep.subr.mxu0 0.0
  %893 = vmatpush1.msra.mxu0 0.0
  %894 = vmatprep.subr.mxu0 0.0
  %895 = vmatpush1.msra.mxu0 0.0
  %896 = vmatprep.subr.mxu0 0.0
  %897 = vmatpush1.msra.mxu0 0.0
  %898 = vmatprep.subr.mxu0 0.0
  %899 = vmatpush1.msra.mxu0 0.0
  %900 = vmatprep.subr.mxu0 0.0
  %901 = vmatpush1.msra.mxu0 0.0
  %902 = vmatprep.subr.mxu0 0.0
  %903 = vmatpush1.msra.mxu0 0.0
  %904 = vmatprep.subr.mxu0 0.0
  %905 = vmatpush1.msra.mxu0 0.0
  %906 = vmatprep.subr.mxu0 0.0
  %907 = vmatpush1.msra.mxu0 0.0
  %908 = vmatprep.subr.mxu0 0.0
  %v909 = vand.u32 %v35, 4294901760
  %v910 = vsub.f32 %v35, %v909
  %v911 = vand.u32 %v910, 4294901760
  %912 = vmatpush1.msra.mxu0 %v911
  %913 = vmatprep.subr.mxu0 0.0
  %v914 = vand.u32 %v34, 4294901760
  %v915 = vsub.f32 %v34, %v914
  %v916 = vand.u32 %v915, 4294901760
  %917 = vmatpush1.msra.mxu0 %v916
  %918 = vmatprep.subr.mxu0 0.0
  %v919 = vand.u32 %v33, 4294901760
  %v920 = vsub.f32 %v33, %v919
  %v921 = vand.u32 %v920, 4294901760
  %922 = vmatpush1.msra.mxu0 %v921
  %923 = vmatprep.subr.mxu0 0.0
  %v924 = vand.u32 %v32, 4294901760
  %v925 = vsub.f32 %v32, %v924
  %v926 = vand.u32 %v925, 4294901760
  %927 = vmatpush1.msra.mxu0 %v926
  %928 = vmatprep.subr.mxu0 0.0
  %v929 = vand.u32 %v31, 4294901760
  %v930 = vsub.f32 %v31, %v929
  %v931 = vand.u32 %v930, 4294901760
  %932 = vmatpush1.msra.mxu0 %v931
  %933 = vmatprep.subr.mxu0 0.0
  %934 = vmatpush2.msra.mxu0 0.0
  %935 = vmatprep.subr.mxu0 0.0
  %936 = vmatpush2.msra.mxu0 0.0
  %937 = vmatprep.subr.mxu0 0.0
  %938 = vmatpush2.msra.mxu0 0.0
  %939 = vmatprep.subr.mxu0 0.0
  %940 = vmatpush2.msra.mxu0 0.0
  %941 = vmatprep.subr.mxu0 0.0
  %942 = vmatpush2.msra.mxu0 0.0
  %943 = vmatprep.subr.mxu0 0.0
  %944 = vmatpush2.msra.mxu0 0.0
  %945 = vmatprep.subr.mxu0 0.0
  %946 = vmatpush2.msra.mxu0 0.0
  %947 = vmatprep.subr.mxu0 0.0
  %948 = vmatpush2.msra.mxu0 0.0
  %949 = vmatprep.subr.mxu0 0.0
  %950 = vmatpush2.msra.mxu0 0.0
  %951 = vmatprep.subr.mxu0 0.0
  %952 = vmatpush2.msra.mxu0 0.0
  %953 = vmatprep.subr.mxu0 0.0
  %954 = vmatpush2.msra.mxu0 0.0
  %955 = vmatprep.subr.mxu0 0.0
  %956 = vmatpush2.msra.mxu0 0.0
  %957 = vmatprep.subr.mxu0 0.0
  %958 = vmatpush2.msra.mxu0 0.0
  %959 = vmatprep.subr.mxu0 0.0
  %960 = vmatpush2.msra.mxu0 0.0
  %961 = vmatprep.subr.mxu0 0.0
  %962 = vmatpush2.msra.mxu0 0.0
  %963 = vmatprep.subr.mxu0 0.0
  %964 = vmatpush2.msra.mxu0 0.0
  %965 = vmatprep.mubr.f32.mxu0 0.0
  %v966 = vand.u32 %v38, 4294901760
  %967 = vmatmul.mubr.f32.gmra.mxu0 %v966
  %v968 = vpop.f32.mrf.mxu0
  %v969 = vadd.f32 %v763, %v968
  %v970 = vpop.f32.mrf.mxu0
  %971 = vmatprep.mubr.f32.mxu0 0.0
  %v972 = vand.u32 %v41, 4294901760
  %973 = vmatmul.mubr.f32.gmra.mxu0 %v972
  %v974 = vpop.f32.mrf.mxu0
  %v975 = vadd.f32 %v771, %v974
  %v976 = vpop.f32.mrf.mxu0
  %977 = vmatprep.mubr.f32.mxu0 0.0
  %v978 = vand.u32 %v44, 4294901760
  %979 = vmatmul.mubr.f32.gmra.mxu0 %v978
  %v980 = vpop.f32.mrf.mxu0
  %v981 = vadd.f32 %v779, %v980
  %v982 = vpop.f32.mrf.mxu0
  %983 = vmatprep.mubr.f32.mxu0 0.0
  %v984 = vand.u32 %v47, 4294901760
  %985 = vmatmul.mubr.f32.gmra.mxu0 %v984
  %v986 = vpop.f32.mrf.mxu0
  %v987 = vadd.f32 %v787, %v986
  %v988 = vpop.f32.mrf.mxu0
  %989 = vmatprep.mubr.f32.mxu0 0.0
  %v990 = vand.u32 %v50, 4294901760
  %991 = vmatmul.mubr.f32.gmra.mxu0 %v990
  %v992 = vpop.f32.mrf.mxu0
  %v993 = vadd.f32 %v795, %v992
  %v994 = vpop.f32.mrf.mxu0
  %995 = vmatprep.mubr.f32.mxu0 0.0
  %v996 = vand.u32 %v53, 4294901760
  %997 = vmatmul.mubr.f32.gmra.mxu0 %v996
  %v998 = vpop.f32.mrf.mxu0
  %v999 = vadd.f32 %v803, %v998
  %v1000 = vpop.f32.mrf.mxu0
  %1001 = vmatprep.mubr.f32.mxu0 0.0
  %v1002 = vand.u32 %v56, 4294901760
  %1003 = vmatmul.mubr.f32.gmra.mxu0 %v1002
  %v1004 = vpop.f32.mrf.mxu0
  %v1005 = vadd.f32 %v811, %v1004
  %v1006 = vpop.f32.mrf.mxu0
  %1007 = vmatprep.mubr.f32.mxu0 0.0
  %v1008 = vand.u32 %v59, 4294901760
  %1009 = vmatmul.mubr.f32.gmra.mxu0 %v1008
  %v1010 = vpop.f32.mrf.mxu0
  %v1011 = vadd.f32 %v819, %v1010
  %v1012 = vpop.f32.mrf.mxu0
  %1013 = vmatprep.mubr.f32.mxu0 0.0
  %v1014 = vand.u32 %v62, 4294901760
  %1015 = vmatmul.mubr.f32.gmra.mxu0 %v1014
  %v1016 = vpop.f32.mrf.mxu0
  %v1017 = vadd.f32 %v827, %v1016
  %v1018 = vpop.f32.mrf.mxu0
  %1019 = vmatprep.mubr.f32.mxu0 0.0
  %v1020 = vand.u32 %v65, 4294901760
  %1021 = vmatmul.mubr.f32.gmra.mxu0 %v1020
  %v1022 = vpop.f32.mrf.mxu0
  %v1023 = vadd.f32 %v835, %v1022
  %v1024 = vpop.f32.mrf.mxu0
  %1025 = vmatprep.mubr.f32.mxu0 0.0
  %v1026 = vand.u32 %v68, 4294901760
  %1027 = vmatmul.mubr.f32.gmra.mxu0 %v1026
  %v1028 = vpop.f32.mrf.mxu0
  %v1029 = vadd.f32 %v843, %v1028
  %v1030 = vpop.f32.mrf.mxu0
  %1031 = vmatprep.mubr.f32.mxu0 0.0
  %v1032 = vand.u32 %v71, 4294901760
  %1033 = vmatmul.mubr.f32.gmra.mxu0 %v1032
  %v1034 = vpop.f32.mrf.mxu0
  %v1035 = vadd.f32 %v851, %v1034
  %v1036 = vpop.f32.mrf.mxu0
  %1037 = vmatprep.mubr.f32.mxu0 0.0
  %v1038 = vand.u32 %v74, 4294901760
  %1039 = vmatmul.mubr.f32.gmra.mxu0 %v1038
  %v1040 = vpop.f32.mrf.mxu0
  %v1041 = vadd.f32 %v859, %v1040
  %v1042 = vpop.f32.mrf.mxu0
  %1043 = vmatprep.mubr.f32.mxu0 0.0
  %v1044 = vand.u32 %v77, 4294901760
  %1045 = vmatmul.mubr.f32.gmra.mxu0 %v1044
  %v1046 = vpop.f32.mrf.mxu0
  %v1047 = vadd.f32 %v867, %v1046
  %v1048 = vpop.f32.mrf.mxu0
  %1049 = vmatprep.mubr.f32.mxu0 0.0
  %v1050 = vand.u32 %v80, 4294901760
  %1051 = vmatmul.mubr.f32.gmra.mxu0 %v1050
  %v1052 = vpop.f32.mrf.mxu0
  %v1053 = vadd.f32 %v875, %v1052
  %v1054 = vpop.f32.mrf.mxu0
  %1055 = vmatprep.mubr.f32.mxu0 0.0
  %v1056 = vand.u32 %v83, 4294901760
  %1057 = vmatmul.mubr.f32.gmra.mxu0 %v1056
  %v1058 = vpop.f32.mrf.mxu0
  %v1059 = vadd.f32 %v883, %v1058
  %v1060 = vpop.f32.mrf.mxu0
  %1061 = vdwg.mxu0
  %1062 = vmatprep.subr.mxu0 0.0
  %1063 = vmatpush1.msra.mxu0 0.0
  %1064 = vmatprep.subr.mxu0 0.0
  %1065 = vmatpush1.msra.mxu0 0.0
  %1066 = vmatprep.subr.mxu0 0.0
  %1067 = vmatpush1.msra.mxu0 0.0
  %1068 = vmatprep.subr.mxu0 0.0
  %1069 = vmatpush1.msra.mxu0 0.0
  %1070 = vmatprep.subr.mxu0 0.0
  %1071 = vmatpush1.msra.mxu0 0.0
  %1072 = vmatprep.subr.mxu0 0.0
  %1073 = vmatpush1.msra.mxu0 0.0
  %1074 = vmatprep.subr.mxu0 0.0
  %1075 = vmatpush1.msra.mxu0 0.0
  %1076 = vmatprep.subr.mxu0 0.0
  %1077 = vmatpush1.msra.mxu0 0.0
  %1078 = vmatprep.subr.mxu0 0.0
  %1079 = vmatpush1.msra.mxu0 0.0
  %1080 = vmatprep.subr.mxu0 0.0
  %1081 = vmatpush1.msra.mxu0 0.0
  %1082 = vmatprep.subr.mxu0 0.0
  %1083 = vmatpush1.msra.mxu0 0.0
  %1084 = vmatprep.subr.mxu0 0.0
  %v1085 = vand.u32 %v35, 4294901760
  %1086 = vmatpush1.msra.mxu0 %v1085
  %1087 = vmatprep.subr.mxu0 0.0
  %v1088 = vand.u32 %v34, 4294901760
  %1089 = vmatpush1.msra.mxu0 %v1088
  %1090 = vmatprep.subr.mxu0 0.0
  %v1091 = vand.u32 %v33, 4294901760
  %1092 = vmatpush1.msra.mxu0 %v1091
  %1093 = vmatprep.subr.mxu0 0.0
  %v1094 = vand.u32 %v32, 4294901760
  %1095 = vmatpush1.msra.mxu0 %v1094
  %1096 = vmatprep.subr.mxu0 0.0
  %v1097 = vand.u32 %v31, 4294901760
  %1098 = vmatpush1.msra.mxu0 %v1097
  %1099 = vmatprep.subr.mxu0 0.0
  %1100 = vmatpush2.msra.mxu0 0.0
  %1101 = vmatprep.subr.mxu0 0.0
  %1102 = vmatpush2.msra.mxu0 0.0
  %1103 = vmatprep.subr.mxu0 0.0
  %1104 = vmatpush2.msra.mxu0 0.0
  %1105 = vmatprep.subr.mxu0 0.0
  %1106 = vmatpush2.msra.mxu0 0.0
  %1107 = vmatprep.subr.mxu0 0.0
  %1108 = vmatpush2.msra.mxu0 0.0
  %1109 = vmatprep.subr.mxu0 0.0
  %1110 = vmatpush2.msra.mxu0 0.0
  %1111 = vmatprep.subr.mxu0 0.0
  %1112 = vmatpush2.msra.mxu0 0.0
  %1113 = vmatprep.subr.mxu0 0.0
  %1114 = vmatpush2.msra.mxu0 0.0
  %1115 = vmatprep.subr.mxu0 0.0
  %1116 = vmatpush2.msra.mxu0 0.0
  %1117 = vmatprep.subr.mxu0 0.0
  %1118 = vmatpush2.msra.mxu0 0.0
  %1119 = vmatprep.subr.mxu0 0.0
  %1120 = vmatpush2.msra.mxu0 0.0
  %1121 = vmatprep.subr.mxu0 0.0
  %1122 = vmatpush2.msra.mxu0 0.0
  %1123 = vmatprep.subr.mxu0 0.0
  %1124 = vmatpush2.msra.mxu0 0.0
  %1125 = vmatprep.subr.mxu0 0.0
  %1126 = vmatpush2.msra.mxu0 0.0
  %1127 = vmatprep.subr.mxu0 0.0
  %1128 = vmatpush2.msra.mxu0 0.0
  %1129 = vmatprep.subr.mxu0 0.0
  %1130 = vmatpush2.msra.mxu0 0.0
  %1131 = vmatprep.mubr.f32.mxu0 0.0
  %v1132 = vand.u32 %v38, 4294901760
  %1133 = vmatmul.mubr.f32.gmra.mxu0 %v1132
  %v1134 = vpop.f32.mrf.mxu0
  %v1135 = vadd.f32 %v969, %v1134
  %v1136 = vpop.f32.mrf.mxu0
  %1137 = vmatprep.mubr.f32.mxu0 0.0
  %v1138 = vand.u32 %v41, 4294901760
  %1139 = vmatmul.mubr.f32.gmra.mxu0 %v1138
  %v1140 = vpop.f32.mrf.mxu0
  %v1141 = vadd.f32 %v975, %v1140
  %v1142 = vpop.f32.mrf.mxu0
  %1143 = vmatprep.mubr.f32.mxu0 0.0
  %v1144 = vand.u32 %v44, 4294901760
  %1145 = vmatmul.mubr.f32.gmra.mxu0 %v1144
  %v1146 = vpop.f32.mrf.mxu0
  %v1147 = vadd.f32 %v981, %v1146
  %v1148 = vpop.f32.mrf.mxu0
  %1149 = vmatprep.mubr.f32.mxu0 0.0
  %v1150 = vand.u32 %v47, 4294901760
  %1151 = vmatmul.mubr.f32.gmra.mxu0 %v1150
  %v1152 = vpop.f32.mrf.mxu0
  %v1153 = vadd.f32 %v987, %v1152
  %v1154 = vpop.f32.mrf.mxu0
  %1155 = vmatprep.mubr.f32.mxu0 0.0
  %v1156 = vand.u32 %v50, 4294901760
  %1157 = vmatmul.mubr.f32.gmra.mxu0 %v1156
  %v1158 = vpop.f32.mrf.mxu0
  %v1159 = vadd.f32 %v993, %v1158
  %v1160 = vpop.f32.mrf.mxu0
  %1161 = vmatprep.mubr.f32.mxu0 0.0
  %v1162 = vand.u32 %v53, 4294901760
  %1163 = vmatmul.mubr.f32.gmra.mxu0 %v1162
  %v1164 = vpop.f32.mrf.mxu0
  %v1165 = vadd.f32 %v999, %v1164
  %v1166 = vpop.f32.mrf.mxu0
  %1167 = vmatprep.mubr.f32.mxu0 0.0
  %v1168 = vand.u32 %v56, 4294901760
  %1169 = vmatmul.mubr.f32.gmra.mxu0 %v1168
  %v1170 = vpop.f32.mrf.mxu0
  %v1171 = vadd.f32 %v1005, %v1170
  %v1172 = vpop.f32.mrf.mxu0
  %1173 = vmatprep.mubr.f32.mxu0 0.0
  %v1174 = vand.u32 %v59, 4294901760
  %1175 = vmatmul.mubr.f32.gmra.mxu0 %v1174
  %v1176 = vpop.f32.mrf.mxu0
  %v1177 = vadd.f32 %v1011, %v1176
  %v1178 = vpop.f32.mrf.mxu0
  %1179 = vmatprep.mubr.f32.mxu0 0.0
  %v1180 = vand.u32 %v62, 4294901760
  %1181 = vmatmul.mubr.f32.gmra.mxu0 %v1180
  %v1182 = vpop.f32.mrf.mxu0
  %v1183 = vadd.f32 %v1017, %v1182
  %v1184 = vpop.f32.mrf.mxu0
  %1185 = vmatprep.mubr.f32.mxu0 0.0
  %v1186 = vand.u32 %v65, 4294901760
  %1187 = vmatmul.mubr.f32.gmra.mxu0 %v1186
  %v1188 = vpop.f32.mrf.mxu0
  %v1189 = vadd.f32 %v1023, %v1188
  %v1190 = vpop.f32.mrf.mxu0
  %1191 = vmatprep.mubr.f32.mxu0 0.0
  %v1192 = vand.u32 %v68, 4294901760
  %1193 = vmatmul.mubr.f32.gmra.mxu0 %v1192
  %v1194 = vpop.f32.mrf.mxu0
  %v1195 = vadd.f32 %v1029, %v1194
  %v1196 = vpop.f32.mrf.mxu0
  %1197 = vmatprep.mubr.f32.mxu0 0.0
  %v1198 = vand.u32 %v71, 4294901760
  %1199 = vmatmul.mubr.f32.gmra.mxu0 %v1198
  %v1200 = vpop.f32.mrf.mxu0
  %v1201 = vadd.f32 %v1035, %v1200
  %v1202 = vpop.f32.mrf.mxu0
  %1203 = vmatprep.mubr.f32.mxu0 0.0
  %v1204 = vand.u32 %v74, 4294901760
  %1205 = vmatmul.mubr.f32.gmra.mxu0 %v1204
  %v1206 = vpop.f32.mrf.mxu0
  %v1207 = vadd.f32 %v1041, %v1206
  %v1208 = vpop.f32.mrf.mxu0
  %1209 = vmatprep.mubr.f32.mxu0 0.0
  %v1210 = vand.u32 %v77, 4294901760
  %1211 = vmatmul.mubr.f32.gmra.mxu0 %v1210
  %v1212 = vpop.f32.mrf.mxu0
  %v1213 = vadd.f32 %v1047, %v1212
  %v1214 = vpop.f32.mrf.mxu0
  %1215 = vmatprep.mubr.f32.mxu0 0.0
  %v1216 = vand.u32 %v80, 4294901760
  %1217 = vmatmul.mubr.f32.gmra.mxu0 %v1216
  %v1218 = vpop.f32.mrf.mxu0
  %v1219 = vadd.f32 %v1053, %v1218
  %v1220 = vpop.f32.mrf.mxu0
  %1221 = vmatprep.mubr.f32.mxu0 0.0
  %v1222 = vand.u32 %v83, 4294901760
  %1223 = vmatmul.mubr.f32.gmra.mxu0 %v1222
  %v1224 = vpop.f32.mrf.mxu0
  %v1225 = vadd.f32 %v1059, %v1224
  %v1226 = vpop.f32.mrf.mxu0
  %1227 = vdwg.mxu0
  %s1228 = sld [smem:[#allocation2]]
  %v1229 = vstv %s1228
  %v1230 = vadd.f32 %v1135, %v1229
  %v1231 = vadd.f32 %v1141, %v1229
  %v1232 = vadd.f32 %v1147, %v1229
  %v1233 = vadd.f32 %v1153, %v1229
  %v1234 = vadd.f32 %v1159, %v1229
  %v1235 = vadd.f32 %v1165, %v1229
  %v1236 = vadd.f32 %v1171, %v1229
  %v1237 = vadd.f32 %v1177, %v1229
  %v1238 = vadd.f32 %v1183, %v1229
  %v1239 = vadd.f32 %v1189, %v1229
  %v1240 = vadd.f32 %v1195, %v1229
  %v1241 = vadd.f32 %v1201, %v1229
  %v1242 = vadd.f32 %v1207, %v1229
  %v1243 = vadd.f32 %v1213, %v1229
  %v1244 = vadd.f32 %v1219, %v1229
  %v1245 = vadd.f32 %v1225, %v1229
  %v1246 = vxor.u32 %v1230, 2147483648
  %v1247 = vxor.u32 %v1231, 2147483648
  %v1248 = vxor.u32 %v1232, 2147483648
  %v1249 = vxor.u32 %v1233, 2147483648
  %v1250 = vxor.u32 %v1234, 2147483648
  %v1251 = vxor.u32 %v1235, 2147483648
  %v1252 = vxor.u32 %v1236, 2147483648
  %v1253 = vxor.u32 %v1237, 2147483648
  %v1254 = vxor.u32 %v1238, 2147483648
  %v1255 = vxor.u32 %v1239, 2147483648
  %v1256 = vxor.u32 %v1240, 2147483648
  %v1257 = vxor.u32 %v1241, 2147483648
  %v1258 = vxor.u32 %v1242, 2147483648
  %v1259 = vxor.u32 %v1243, 2147483648
  %v1260 = vxor.u32 %v1244, 2147483648
  %v1261 = vxor.u32 %v1245, 2147483648
  %v1262 = vmul.f32 %v1246, 1.442695
  %v1263 = vpow.pop %v1262
  %v1264 = vmul.f32 %v1247, 1.442695
  %v1265 = vpow.pop %v1264
  %v1266 = vmul.f32 %v1248, 1.442695
  %v1267 = vpow.pop %v1266
  %v1268 = vmul.f32 %v1249, 1.442695
  %v1269 = vpow.pop %v1268
  %v1270 = vmul.f32 %v1250, 1.442695
  %v1271 = vpow.pop %v1270
  %v1272 = vmul.f32 %v1251, 1.442695
  %v1273 = vpow.pop %v1272
  %v1274 = vmul.f32 %v1252, 1.442695
  %v1275 = vpow.pop %v1274
  %v1276 = vmul.f32 %v1253, 1.442695
  %v1277 = vpow.pop %v1276
  %v1278 = vmul.f32 %v1254, 1.442695
  %v1279 = vpow.pop %v1278
  %v1280 = vmul.f32 %v1255, 1.442695
  %v1281 = vpow.pop %v1280
  %v1282 = vmul.f32 %v1256, 1.442695
  %v1283 = vpow.pop %v1282
  %v1284 = vmul.f32 %v1257, 1.442695
  %v1285 = vpow.pop %v1284
  %v1286 = vmul.f32 %v1258, 1.442695
  %v1287 = vpow.pop %v1286
  %v1288 = vmul.f32 %v1259, 1.442695
  %v1289 = vpow.pop %v1288
  %v1290 = vmul.f32 %v1260, 1.442695
  %v1291 = vpow.pop %v1290
  %v1292 = vmul.f32 %v1261, 1.442695
  %v1293 = vpow.pop %v1292
  %v1294 = vadd.f32 %v1263, 1.0
  %v1295 = vadd.f32 %v1265, 1.0
  %v1296 = vadd.f32 %v1267, 1.0
  %v1297 = vadd.f32 %v1269, 1.0
  %v1298 = vadd.f32 %v1271, 1.0
  %v1299 = vadd.f32 %v1273, 1.0
  %v1300 = vadd.f32 %v1275, 1.0
  %v1301 = vadd.f32 %v1277, 1.0
  %v1302 = vadd.f32 %v1279, 1.0
  %v1303 = vadd.f32 %v1281, 1.0
  %v1304 = vadd.f32 %v1283, 1.0
  %v1305 = vadd.f32 %v1285, 1.0
  %v1306 = vadd.f32 %v1287, 1.0
  %v1307 = vadd.f32 %v1289, 1.0
  %v1308 = vadd.f32 %v1291, 1.0
  %v1309 = vadd.f32 %v1293, 1.0
  %v1310 = vrcp.pop %v1294
  %v1311 = vmul.f32 1.0, %v1310
  %v1312 = vrcp.pop %v1295
  %v1313 = vmul.f32 1.0, %v1312
  %v1314 = vrcp.pop %v1296
  %v1315 = vmul.f32 1.0, %v1314
  %v1316 = vrcp.pop %v1297
  %v1317 = vmul.f32 1.0, %v1316
  %v1318 = vrcp.pop %v1298
  %v1319 = vmul.f32 1.0, %v1318
  %v1320 = vrcp.pop %v1299
  %v1321 = vmul.f32 1.0, %v1320
  %v1322 = vrcp.pop %v1300
  %v1323 = vmul.f32 1.0, %v1322
  %v1324 = vrcp.pop %v1301
  %v1325 = vmul.f32 1.0, %v1324
  %v1326 = vrcp.pop %v1302
  %v1327 = vmul.f32 1.0, %v1326
  %v1328 = vrcp.pop %v1303
  %v1329 = vmul.f32 1.0, %v1328
  %v1330 = vrcp.pop %v1304
  %v1331 = vmul.f32 1.0, %v1330
  %v1332 = vrcp.pop %v1305
  %v1333 = vmul.f32 1.0, %v1332
  %v1334 = vrcp.pop %v1306
  %v1335 = vmul.f32 1.0, %v1334
  %v1336 = vrcp.pop %v1307
  %v1337 = vmul.f32 1.0, %v1336
  %v1338 = vrcp.pop %v1308
  %v1339 = vmul.f32 1.0, %v1338
  %v1340 = vrcp.pop %v1309
  %v1341 = vmul.f32 1.0, %v1340
  %vm1342 = vcmask 7168
  %1343 = vst.msk [vmem:[%s3] sm:$0xff] %vm1342, %v1311
  %1344 = vst.msk [vmem:[%s3 + $0x8] sm:$0xff] %vm1342, %v1313
  %1345 = vst.msk [vmem:[%s3 + $0x10] sm:$0xff] %vm1342, %v1315
  %1346 = vst.msk [vmem:[%s3 + $0x18] sm:$0xff] %vm1342, %v1317
  %1347 = vst.msk [vmem:[%s3 + $0x20] sm:$0xff] %vm1342, %v1319
  %1348 = vst.msk [vmem:[%s3 + $0x28] sm:$0xff] %vm1342, %v1321
  %1349 = vst.msk [vmem:[%s3 + $0x30] sm:$0xff] %vm1342, %v1323
  %1350 = vst.msk [vmem:[%s3 + $0x38] sm:$0xff] %vm1342, %v1325
  %1351 = vst.msk [vmem:[%s3 + $0x40] sm:$0xff] %vm1342, %v1327
  %1352 = vst.msk [vmem:[%s3 + $0x48] sm:$0xff] %vm1342, %v1329
  %1353 = vst.msk [vmem:[%s3 + $0x50] sm:$0xff] %vm1342, %v1331
  %1354 = vst.msk [vmem:[%s3 + $0x58] sm:$0xff] %vm1342, %v1333
  %1355 = vst.msk [vmem:[%s3 + $0x60] sm:$0xff] %vm1342, %v1335
  %1356 = vst.msk [vmem:[%s3 + $0x68] sm:$0xff] %vm1342, %v1337
  %1357 = vst.msk [vmem:[%s3 + $0x70] sm:$0xff] %vm1342, %v1339
  %1358 = vst.msk [vmem:[%s3 + $0x78] sm:$0xff] %vm1342, %v1341
  // Predicated region
  $region14: #{tpu_custom_call.1} parent=0 // pred_check
    _
  $region15: #{tpu_custom_call.1} parent=0 // pred_check_branch
    %1360 = sbr.rel (0) target = $region17
  $region16: #{tpu_custom_call.1} parent=0 // pred_region
    _
  $region17: #{tpu_custom_call.1} parent=0 // pred_fallthru
    _
  // Predicated region
  $region18: #{tpu_custom_call.1} parent=0 // pred_check
    _
  $region19: #{tpu_custom_call.1} parent=0 // pred_check_branch
    %1362 = sbr.rel (0) target = $region21
  $region20: #{tpu_custom_call.1} parent=0 // pred_region
    _
  $region21: #{tpu_custom_call.1} parent=0 // pred_fallthru
    _

</llo_original>
